<compile_context>
chip_gen: v6e
topology: v6e:2x2x1
jax: 0.10.0
libtpu: 0.0.40
codegen_flags: <defaults>
</compile_context>

<pallas_src>
import functools

import jax
import jax.numpy as jnp
from jax.experimental import pallas as pl
from jax.experimental.pallas import tpu as pltpu


def _w_coord(n_rows, W):
    """(n_rows, 1) int32: the w (column) coordinate of each flat spatial row."""
    idx = jax.lax.broadcasted_iota(jnp.int32, (n_rows, 1), 0)
    if (W & (W - 1)) == 0:          # power of two: cheap bitwise-and, no int mod
        return idx & (W - 1)
    return idx % W


# ----------------------------------------------------------------------------
# Pallas kernel: conv1x1 -> BN -> ReLU -> conv3x3(pad=1) -> BN -> ReLU ->
#                conv1x1 -> BN -> (+identity) -> ReLU, for one (image, row-tile).
# ----------------------------------------------------------------------------
def bottleneck_kernel(x_ref, w1_ref, s1_ref, b1_ref,
                      w2_ref, s2_ref, b2_ref,
                      w3_ref, s3_ref, b3_ref,
                      out_ref, pad_ref, *, H, W, TH):
    width = w1_ref.shape[1]
    THW = TH * W
    th = pl.program_id(1)
    n_tiles = pl.num_programs(1)

    def conv1_bn_relu(x_rows_bf16):
        h = jnp.dot(x_rows_bf16, w1_ref[...], preferred_element_type=jnp.float32)
        return jnp.maximum(h * s1_ref[...] + b1_ref[...], 0.0)

    def w_shift_cat(h):
        # h: (n, width) f32, n a multiple of W.  +-1 shifts along W are XLU
        # sublane rolls on the flat layout plus a cheap (n, 1) edge mask.
        n = h.shape[0]
        w_idx = _w_coord(n, W)
        left = jnp.where(w_idx != 0, pltpu.roll(h, 1, axis=0), 0.0)           # h[., w-1]
        right = jnp.where(w_idx != W - 1, pltpu.roll(h, n - 1, axis=0), 0.0)  # h[., w+1]
        return jnp.concatenate([left, h, right], axis=1)                      # (n, 3*width)

    # --- conv1x1 + BN1 + ReLU on this tile's rows; build the bf16 3x3 slab ----
    start_i = pl.multiple_of(th * THW, W)
    cat_i = w_shift_cat(conv1_bn_relu(x_ref[pl.ds(start_i, THW), :]))
    pad_ref[W:W + THW, :] = cat_i.astype(jnp.bfloat16)        # single cast, bf16 slab

    # Top halo image-row (row th*TH - 1); zeroed for the first tile.
    start_t = pl.multiple_of(jnp.maximum(th * TH - 1, 0) * W, W)
    cat_t = w_shift_cat(conv1_bn_relu(x_ref[pl.ds(start_t, W), :]))
    top_on = (th > 0).astype(jnp.float32)
    pad_ref[0:W, :] = (cat_t * top_on).astype(jnp.bfloat16)

    # Bottom halo image-row (row th*TH + TH); zeroed for the last tile.
    start_b = pl.multiple_of(jnp.minimum(th * TH + TH, H - 1) * W, W)
    cat_b = w_shift_cat(conv1_bn_relu(x_ref[pl.ds(start_b, W), :]))
    bot_on = (th < n_tiles - 1).astype(jnp.float32)
    pad_ref[W + THW:W + THW + W, :] = (cat_b * bot_on).astype(jnp.bfloat16)

    # --- conv3x3 as 3 fat K=3*width bf16 matmuls over the slab + BN2 + ReLU ---
    acc = jnp.zeros((THW, width), jnp.float32)
    for kh in range(3):                                       # aligned sublane slices
        acc = acc + jnp.dot(pad_ref[kh * W:kh * W + THW, :], w2_ref[kh],
                            preferred_element_type=jnp.float32)
    h2 = jnp.maximum(acc * s2_ref[...] + b2_ref[...], 0.0)    # (THW, width) f32

    # --- conv1x1 + BN3 + identity residual + ReLU (x re-read in the epilogue) --
    h3 = jnp.dot(h2.astype(jnp.bfloat16), w3_ref[...],
                 preferred_element_type=jnp.float32)
    h3 = h3 * s3_ref[...] + b3_ref[...]
    identity = x_ref[pl.ds(start_i, THW), :].astype(jnp.float32)
    out_ref[...] = jnp.maximum(h3 + identity, 0.0).astype(out_ref.dtype)


# ----------------------------------------------------------------------------
# Wrappers
# ----------------------------------------------------------------------------
def bottleneck_forward_nhwc(x_flat, params, H, W, *, row_tile_h=None):
    """x_flat: (N, H*W, Cin) bf16 (NHWC with spatial flattened) -> (N, H*W, Cout) bf16."""
    N, HW, Cin = x_flat.shape
    assert HW == H * W
    assert x_flat.dtype == jnp.bfloat16
    # bf16 packs 2 rows per sublane: keep every kh*W / tile-row offset 16-aligned.
    assert W % 16 == 0, "W must be a multiple of 16 (bf16 sublane alignment); pad W"

    w1, s1, b1 = params["w1"], params["s1"], params["b1"]
    w2, s2, b2 = params["w2"], params["s2"], params["b2"]   # w2: (3, 3*width, width) bf16
    w3, s3, b3 = params["w3"], params["s3"], params["b3"]
    width = w1.shape[1]
    Cout = w3.shape[1]
    assert Cin == Cout, "identity residual requires inplanes == planes*expansion"

    TH = H if row_tile_h is None else row_tile_h
    assert H % TH == 0, "row_tile_h must divide H"
    n_tiles = H // TH
    THW = TH * W

    def full_spec(arr):
        ndim = arr.ndim
        return pl.BlockSpec(arr.shape, lambda n, t: (0,) * ndim)

    param_bytes = sum(int(a.size) * int(a.dtype.itemsize)
                      for a in (w1, s1, b1, w2, s2, b2, w3, s3, b3))
    flops = int(2 * N * HW * (Cin * width + 9 * width * width + width * Cout))
    bytes_accessed = int(2 * N * HW * (Cin + Cout) + param_bytes)

    # VMEM budget: double-buffered bf16 activations + (singly fetched, doubly
    # allocated) params + bf16 pad slab + rough f32 temporaries; capped at 3/4
    # of physical VMEM (~48 MiB on v7x, ~96 MiB on v5e/v6e) for compiler headroom.
    per_step = (2 * 2 * HW * Cin + 2 * 2 * THW * Cout + 2 * param_bytes
                + 2 * (TH + 2) * W * 3 * width
                + 4 * THW * (6 * width + Cin + Cout))
    try:
        phys_vmem = int(pltpu.get_tpu_info().vmem_capacity_bytes)
    except Exception:
        phys_vmem = 64 * 1024 * 1024          # conservative (v7x per-core VMEM)
    vmem_limit = int(min((phys_vmem * 3) // 4,
                         max(32 * 1024 * 1024, 2 * per_step)))

    kernel = functools.partial(bottleneck_kernel, H=H, W=W, TH=TH)
    # NOTE(perf): weight/scale/bias BlockSpecs use constant index_maps, so Pallas
    # DMAs them once and reuses the buffers for the whole grid (no per-step
    # re-fetch); their buffer allocation is included in `per_step` above.
    out = pl.pallas_call(
        kernel,
        out_shape=jax.ShapeDtypeStruct((N, HW, Cout), jnp.bfloat16),
        grid_spec=pltpu.PrefetchScalarGridSpec(
            num_scalar_prefetch=0,
            grid=(N, n_tiles),
            in_specs=[
                pl.BlockSpec((None, HW, Cin), lambda n, t: (n, 0, 0)),
                full_spec(w1), full_spec(s1), full_spec(b1),
                full_spec(w2), full_spec(s2), full_spec(b2),
                full_spec(w3), full_spec(s3), full_spec(b3),
            ],
            out_specs=pl.BlockSpec((None, THW, Cout), lambda n, t: (n, t, 0)),
            scratch_shapes=[pltpu.VMEM(((TH + 2) * W, 3 * width), jnp.bfloat16)],
        ),
        compiler_params=pltpu.CompilerParams(
            dimension_semantics=("parallel", "parallel"),
            vmem_limit_bytes=vmem_limit,
        ),
        cost_estimate=pl.CostEstimate(
            flops=flops, transcendentals=0, bytes_accessed=bytes_accessed),
    )(x_flat, w1, s1, b1, w2, s2, b2, w3, s3, b3)
    return out


def bottleneck_forward_nchw(x_nchw, params, *, row_tile_h=None):
    """Convenience adapter matching the PyTorch NCHW API.  The transposes cost a
    full extra HBM pass over the activations; prefer the NHWC entry point."""
    N, Cin, H, W = x_nchw.shape
    x_flat = jnp.transpose(x_nchw, (0, 2, 3, 1)).reshape(N, H * W, Cin)
    out = bottleneck_forward_nhwc(x_flat.astype(jnp.bfloat16), params, H, W,
                                  row_tile_h=row_tile_h)
    Cout = out.shape[-1]
    return jnp.transpose(out.reshape(N, H, W, Cout), (0, 3, 1, 2))


# ----------------------------------------------------------------------------
# Pure-JAX reference (bf16 matmul inputs, f32 accumulation — mirrors kernel)
# ----------------------------------------------------------------------------
def reference_forward_nhwc(x_nhwc_bf16, w1, w2_hwio, w3, s1, b1, s2, b2, s3, b3):
    bf = jnp.bfloat16
    x32 = x_nhwc_bf16.astype(jnp.float32)
    h = jnp.einsum("nhwc,cd->nhwd", x_nhwc_bf16, w1.astype(bf),
                   preferred_element_type=jnp.float32)
    h = jnp.maximum(h * s1 + b1, 0.0)
    h = jax.lax.conv_general_dilated(
        h.astype(bf), w2_hwio.astype(bf), window_strides=(1, 1),
        padding=((1, 1), (1, 1)), dimension_numbers=("NHWC", "HWIO", "NHWC"),
        preferred_element_type=jnp.float32)
    h = jnp.maximum(h * s2 + b2, 0.0)
    h = jnp.einsum("nhwc,cd->nhwd", h.astype(bf), w3.astype(bf),
                   preferred_element_type=jnp.float32)
    h = h * s3 + b3
    return jnp.maximum(h + x32, 0.0)


def fold_bn(gamma, beta, mean, var, eps=1e-5):
    scale = gamma / jnp.sqrt(var + eps)
    bias = beta - mean * scale
    return scale[None, :], bias[None, :]   # (1, C) for lane-wise broadcast


if __name__ == "__main__":
    # Small config consistent with the module:
    #   inplanes = planes * expansion = 16, planes = 4, base_width = 64,
    #   groups = 1 -> width = 4; stride = 1, downsample = None.
    N, inplanes, H, W = 2, 16, 16, 16
    planes, expansion = 4, 4
    width = planes                 # planes * (64/64) * 1
    cout = planes * expansion      # == inplanes -> identity residual

    key = jax.random.PRNGKey(0)
    keys = jax.random.split(key, 8)

    # Activations live in NHWC / bf16 at the HBM boundary (no NCHW transposes).
    x_nhwc = jax.random.normal(keys[0], (N, H, W, inplanes), dtype=jnp.float32)
    x_bf16 = x_nhwc.astype(jnp.bfloat16)

    # Conv weights (defined directly in channel-last friendly layouts).
    w1 = 0.1 * jax.random.normal(keys[1], (inplanes, width), dtype=jnp.float32)
    w2_hwio = 0.1 * jax.random.normal(keys[2], (3, 3, width, width), dtype=jnp.float32)
    w3 = 0.1 * jax.random.normal(keys[3], (width, cout), dtype=jnp.float32)

    # BatchNorm (eval-mode) parameters, folded to scale/bias.
    def bn_params(k, c):
        ks = jax.random.split(k, 4)
        gamma = 1.0 + 0.1 * jax.random.normal(ks[0], (c,), dtype=jnp.float32)
        beta = 0.1 * jax.random.normal(ks[1], (c,), dtype=jnp.float32)
        mean = 0.1 * jax.random.normal(ks[2], (c,), dtype=jnp.float32)
        var = jnp.abs(jax.random.normal(ks[3], (c,), dtype=jnp.float32)) + 0.5
        return fold_bn(gamma, beta, mean, var)

    s1, b1 = bn_params(keys[4], width)
    s2, b2 = bn_params(keys[5], width)
    s3, b3 = bn_params(keys[6], cout)

    params = {
        "w1": w1.astype(jnp.bfloat16), "s1": s1, "b1": b1,
        # 3x3 weight consumed as (3, 3*width_in, width_out), bf16 (kw-major rows).
        "w2": w2_hwio.astype(jnp.bfloat16).reshape(3, 3 * width, width),
        "s2": s2, "b2": b2,
        "w3": w3.astype(jnp.bfloat16), "s3": s3, "b3": b3,
    }

    x_flat = x_bf16.reshape(N, H * W, inplanes)
    # row_tile_h=8 exercises the row-tiled path (grid = (N, H//8)).
    out = jax.block_until_ready(
        bottleneck_forward_nhwc(x_flat, params, H, W, row_tile_h=8))
    ref = jax.block_until_ready(
        reference_forward_nhwc(x_bf16, w1, w2_hwio, w3, s1, b1, s2, b2, s3, b3))

    assert out.shape == (N, H * W, cout)
    out_img = out.reshape(N, H, W, cout).astype(jnp.float32)
    assert jnp.allclose(out_img, ref, rtol=2e-2, atol=2e-2), "mismatch vs JAX reference"

    print("KERNEL_OK")
</pallas_src>

<mosaic_0001>
module attributes {stable_mosaic.version = 11 : i64} {
  func.func @bottleneck_kernel(%arg0: i32, %arg1: i32, %arg2: memref<1x256x16xbf16, #tpu.memory_space<vmem>>, %arg3: memref<16x4xbf16, #tpu.memory_space<vmem>>, %arg4: memref<1x4xf32, #tpu.memory_space<vmem>>, %arg5: memref<1x4xf32, #tpu.memory_space<vmem>>, %arg6: memref<3x12x4xbf16, #tpu.memory_space<vmem>>, %arg7: memref<1x4xf32, #tpu.memory_space<vmem>>, %arg8: memref<1x4xf32, #tpu.memory_space<vmem>>, %arg9: memref<4x16xbf16, #tpu.memory_space<vmem>>, %arg10: memref<1x16xf32, #tpu.memory_space<vmem>>, %arg11: memref<1x16xf32, #tpu.memory_space<vmem>>, %arg12: memref<1x128x16xbf16, #tpu.memory_space<vmem>>, %arg13: memref<160x12xbf16, #tpu.memory_space<vmem>>) attributes {dimension_semantics = [#tpu.dimension_semantics<parallel>, #tpu.dimension_semantics<parallel>], iteration_bounds = array<i64: 2, 2>, scalar_prefetch = 0 : i64, scratch_operands = 1 : i64, tpu.core_type = #tpu.core_type<tc>, window_params = [{transform_indices = @transform_0, window_bounds = array<i64: 1, 256, 16>}, {pipeline_mode = #tpu.pipeline_mode<synchronous>, transform_indices = @transform_1, window_bounds = array<i64: 16, 4>}, {pipeline_mode = #tpu.pipeline_mode<synchronous>, transform_indices = @transform_2, window_bounds = array<i64: 1, 4>}, {pipeline_mode = #tpu.pipeline_mode<synchronous>, transform_indices = @transform_3, window_bounds = array<i64: 1, 4>}, {pipeline_mode = #tpu.pipeline_mode<synchronous>, transform_indices = @transform_4, window_bounds = array<i64: 3, 12, 4>}, {pipeline_mode = #tpu.pipeline_mode<synchronous>, transform_indices = @transform_5, window_bounds = array<i64: 1, 4>}, {pipeline_mode = #tpu.pipeline_mode<synchronous>, transform_indices = @transform_6, window_bounds = array<i64: 1, 4>}, {pipeline_mode = #tpu.pipeline_mode<synchronous>, transform_indices = @transform_7, window_bounds = array<i64: 4, 16>}, {pipeline_mode = #tpu.pipeline_mode<synchronous>, transform_indices = @transform_8, window_bounds = array<i64: 1, 16>}, {pipeline_mode = #tpu.pipeline_mode<synchronous>, transform_indices = @transform_9, window_bounds = array<i64: 1, 16>}, {transform_indices = @transform_10, window_bounds = array<i64: 1, 128, 16>}]} {
    %c128_i32 = arith.constant 128 : i32
    %0 = arith.muli %arg1, %c128_i32 : i32
    %1 = tpu.assume_multiple %0, 16 : i32
    %c0 = arith.constant 0 : index
    %2 = arith.index_cast %1 : i32 to index
    %c0_0 = arith.constant 0 : index
    %3 = vector.load %arg2[%c0, %2, %c0_0] : memref<1x256x16xbf16, #tpu.memory_space<vmem>>, vector<1x128x16xbf16>
    %4 = vector.shape_cast %3 : vector<1x128x16xbf16> to vector<128x16xbf16>
    %c0_1 = arith.constant 0 : index
    %c0_2 = arith.constant 0 : index
    %5 = vector.load %arg3[%c0_1, %c0_2] : memref<16x4xbf16, #tpu.memory_space<vmem>>, vector<16x4xbf16>
    %cst = arith.constant dense<0.000000e+00> : vector<128x4xf32>
    %6 = tpu.matmul %4, %5, %cst {dimension_numbers = #tpu.dot_dimension_numbers<[1], [0], [0], [1], [0, 0, 1, 1], [], []>} : vector<128x16xbf16>, vector<16x4xbf16>, vector<128x4xf32> -> vector<128x4xf32>
    %c0_3 = arith.constant 0 : index
    %c0_4 = arith.constant 0 : index
    %7 = vector.load %arg4[%c0_3, %c0_4] : memref<1x4xf32, #tpu.memory_space<vmem>>, vector<1x4xf32>
    %8 = vector.broadcast %7 : vector<1x4xf32> to vector<128x4xf32>
    %9 = arith.mulf %6, %8 : vector<128x4xf32>
    %c0_5 = arith.constant 0 : index
    %c0_6 = arith.constant 0 : index
    %10 = vector.load %arg5[%c0_5, %c0_6] : memref<1x4xf32, #tpu.memory_space<vmem>>, vector<1x4xf32>
    %11 = vector.broadcast %10 : vector<1x4xf32> to vector<128x4xf32>
    %12 = arith.addf %9, %11 : vector<128x4xf32>
    %cst_7 = arith.constant 0.000000e+00 : f32
    %13 = vector.broadcast %cst_7 : f32 to vector<128x4xf32>
    %14 = arith.maximumf %12, %13 : vector<128x4xf32>
    %15 = tpu.iota {dimensions = array<i32: 0>} : vector<128x1xi32>
    %c15_i32 = arith.constant 15 : i32
    %16 = vector.broadcast %c15_i32 : i32 to vector<128x1xi32>
    %17 = arith.andi %15, %16 : vector<128x1xi32>
    %c0_i32 = arith.constant 0 : i32
    %18 = vector.broadcast %c0_i32 : i32 to vector<128x1xi32>
    %19 = arith.cmpi ne, %17, %18 : vector<128x1xi32>
    %c1_i32 = arith.constant 1 : i32
    %20 = tpu.dynamic_rotate %14 by %c1_i32 dim 0 : vector<128x4xf32>, i32 -> vector<128x4xf32>
    %cst_8 = arith.constant 0.000000e+00 : f32
    %21 = vector.shape_cast %19 : vector<128x1xi1> to vector<128x1xi1>
    %22 = vector.broadcast %21 : vector<128x1xi1> to vector<128x4xi1>
    %23 = vector.broadcast %cst_8 : f32 to vector<128x4xf32>
    %24 = arith.select %22, %20, %23 : vector<128x4xi1>, vector<128x4xf32>
    %c15_i32_9 = arith.constant 15 : i32
    %25 = vector.broadcast %c15_i32_9 : i32 to vector<128x1xi32>
    %26 = arith.cmpi ne, %17, %25 : vector<128x1xi32>
    %c127_i32 = arith.constant 127 : i32
    %27 = tpu.dynamic_rotate %14 by %c127_i32 dim 0 : vector<128x4xf32>, i32 -> vector<128x4xf32>
    %cst_10 = arith.constant 0.000000e+00 : f32
    %28 = vector.shape_cast %26 : vector<128x1xi1> to vector<128x1xi1>
    %29 = vector.broadcast %28 : vector<128x1xi1> to vector<128x4xi1>
    %30 = vector.broadcast %cst_10 : f32 to vector<128x4xf32>
    %31 = arith.select %29, %27, %30 : vector<128x4xi1>, vector<128x4xf32>
    %32 = tpu.concatenate %24, %14, %31 in 1 : vector<128x4xf32>, vector<128x4xf32>, vector<128x4xf32> -> vector<128x12xf32>
    %33 = arith.truncf %32 : vector<128x12xf32> to vector<128x12xbf16>
    %c16 = arith.constant 16 : index
    %c0_11 = arith.constant 0 : index
    %34 = vector.load %arg13[%c16, %c0_11] : memref<160x12xbf16, #tpu.memory_space<vmem>>, vector<128x12xbf16>
    tpu.vector_store %arg13[%c16, %c0_11], %33 {strides = array<i32>} : memref<160x12xbf16, #tpu.memory_space<vmem>>, vector<128x12xbf16>,
    %c8_i32 = arith.constant 8 : i32
    %35 = arith.muli %arg1, %c8_i32 : i32
    %c1_i32_12 = arith.constant 1 : i32
    %36 = arith.subi %35, %c1_i32_12 : i32
    %c0_i32_13 = arith.constant 0 : i32
    %37 = arith.maxsi %36, %c0_i32_13 : i32
    %c16_i32 = arith.constant 16 : i32
    %38 = arith.muli %37, %c16_i32 : i32
    %39 = tpu.assume_multiple %38, 16 : i32
    %c0_14 = arith.constant 0 : index
    %40 = arith.index_cast %39 : i32 to index
    %c0_15 = arith.constant 0 : index
    %41 = vector.load %arg2[%c0_14, %40, %c0_15] : memref<1x256x16xbf16, #tpu.memory_space<vmem>>, vector<1x16x16xbf16>
    %42 = vector.shape_cast %41 : vector<1x16x16xbf16> to vector<16x16xbf16>
    %c0_16 = arith.constant 0 : index
    %c0_17 = arith.constant 0 : index
    %43 = vector.load %arg3[%c0_16, %c0_17] : memref<16x4xbf16, #tpu.memory_space<vmem>>, vector<16x4xbf16>
    %cst_18 = arith.constant dense<0.000000e+00> : vector<16x4xf32>
    %44 = tpu.matmul %42, %43, %cst_18 {dimension_numbers = #tpu.dot_dimension_numbers<[1], [0], [0], [1], [0, 0, 1, 1], [], []>} : vector<16x16xbf16>, vector<16x4xbf16>, vector<16x4xf32> -> vector<16x4xf32>
    %c0_19 = arith.constant 0 : index
    %c0_20 = arith.constant 0 : index
    %45 = vector.load %arg4[%c0_19, %c0_20] : memref<1x4xf32, #tpu.memory_space<vmem>>, vector<1x4xf32>
    %46 = vector.broadcast %45 : vector<1x4xf32> to vector<16x4xf32>
    %47 = arith.mulf %44, %46 : vector<16x4xf32>
    %c0_21 = arith.constant 0 : index
    %c0_22 = arith.constant 0 : index
    %48 = vector.load %arg5[%c0_21, %c0_22] : memref<1x4xf32, #tpu.memory_space<vmem>>, vector<1x4xf32>
    %49 = vector.broadcast %48 : vector<1x4xf32> to vector<16x4xf32>
    %50 = arith.addf %47, %49 : vector<16x4xf32>
    %cst_23 = arith.constant 0.000000e+00 : f32
    %51 = vector.broadcast %cst_23 : f32 to vector<16x4xf32>
    %52 = arith.maximumf %50, %51 : vector<16x4xf32>
    %53 = tpu.iota {dimensions = array<i32: 0>} : vector<16x1xi32>
    %c15_i32_24 = arith.constant 15 : i32
    %54 = vector.broadcast %c15_i32_24 : i32 to vector<16x1xi32>
    %55 = arith.andi %53, %54 : vector<16x1xi32>
    %c0_i32_25 = arith.constant 0 : i32
    %56 = vector.broadcast %c0_i32_25 : i32 to vector<16x1xi32>
    %57 = arith.cmpi ne, %55, %56 : vector<16x1xi32>
    %c1_i32_26 = arith.constant 1 : i32
    %58 = tpu.dynamic_rotate %52 by %c1_i32_26 dim 0 : vector<16x4xf32>, i32 -> vector<16x4xf32>
    %cst_27 = arith.constant 0.000000e+00 : f32
    %59 = vector.shape_cast %57 : vector<16x1xi1> to vector<16x1xi1>
    %60 = vector.broadcast %59 : vector<16x1xi1> to vector<16x4xi1>
    %61 = vector.broadcast %cst_27 : f32 to vector<16x4xf32>
    %62 = arith.select %60, %58, %61 : vector<16x4xi1>, vector<16x4xf32>
    %c15_i32_28 = arith.constant 15 : i32
    %63 = vector.broadcast %c15_i32_28 : i32 to vector<16x1xi32>
    %64 = arith.cmpi ne, %55, %63 : vector<16x1xi32>
    %c15_i32_29 = arith.constant 15 : i32
    %65 = tpu.dynamic_rotate %52 by %c15_i32_29 dim 0 : vector<16x4xf32>, i32 -> vector<16x4xf32>
    %cst_30 = arith.constant 0.000000e+00 : f32
    %66 = vector.shape_cast %64 : vector<16x1xi1> to vector<16x1xi1>
    %67 = vector.broadcast %66 : vector<16x1xi1> to vector<16x4xi1>
    %68 = vector.broadcast %cst_30 : f32 to vector<16x4xf32>
    %69 = arith.select %67, %65, %68 : vector<16x4xi1>, vector<16x4xf32>
    %70 = tpu.concatenate %62, %52, %69 in 1 : vector<16x4xf32>, vector<16x4xf32>, vector<16x4xf32> -> vector<16x12xf32>
    %c0_i32_31 = arith.constant 0 : i32
    %71 = arith.cmpi sgt, %arg1, %c0_i32_31 : i32
    %72 = arith.extui %71 : i1 to i32
    %73 = arith.sitofp %72 : i32 to f32
    %74 = vector.broadcast %73 : f32 to vector<16x12xf32>
    %75 = arith.mulf %70, %74 : vector<16x12xf32>
    %76 = arith.truncf %75 : vector<16x12xf32> to vector<16x12xbf16>
    %c0_32 = arith.constant 0 : index
    %c0_33 = arith.constant 0 : index
    %77 = vector.load %arg13[%c0_32, %c0_33] : memref<160x12xbf16, #tpu.memory_space<vmem>>, vector<16x12xbf16>
    tpu.vector_store %arg13[%c0_32, %c0_33], %76 {strides = array<i32>} : memref<160x12xbf16, #tpu.memory_space<vmem>>, vector<16x12xbf16>,
    %c8_i32_34 = arith.constant 8 : i32
    %78 = arith.muli %arg1, %c8_i32_34 : i32
    %c8_i32_35 = arith.constant 8 : i32
    %79 = arith.addi %78, %c8_i32_35 : i32
    %c15_i32_36 = arith.constant 15 : i32
    %80 = arith.minsi %79, %c15_i32_36 : i32
    %c16_i32_37 = arith.constant 16 : i32
    %81 = arith.muli %80, %c16_i32_37 : i32
    %82 = tpu.assume_multiple %81, 16 : i32
    %c0_38 = arith.constant 0 : index
    %83 = arith.index_cast %82 : i32 to index
    %c0_39 = arith.constant 0 : index
    %84 = vector.load %arg2[%c0_38, %83, %c0_39] : memref<1x256x16xbf16, #tpu.memory_space<vmem>>, vector<1x16x16xbf16>
    %85 = vector.shape_cast %84 : vector<1x16x16xbf16> to vector<16x16xbf16>
    %c0_40 = arith.constant 0 : index
    %c0_41 = arith.constant 0 : index
    %86 = vector.load %arg3[%c0_40, %c0_41] : memref<16x4xbf16, #tpu.memory_space<vmem>>, vector<16x4xbf16>
    %cst_42 = arith.constant dense<0.000000e+00> : vector<16x4xf32>
    %87 = tpu.matmul %85, %86, %cst_42 {dimension_numbers = #tpu.dot_dimension_numbers<[1], [0], [0], [1], [0, 0, 1, 1], [], []>} : vector<16x16xbf16>, vector<16x4xbf16>, vector<16x4xf32> -> vector<16x4xf32>
    %c0_43 = arith.constant 0 : index
    %c0_44 = arith.constant 0 : index
    %88 = vector.load %arg4[%c0_43, %c0_44] : memref<1x4xf32, #tpu.memory_space<vmem>>, vector<1x4xf32>
    %89 = vector.broadcast %88 : vector<1x4xf32> to vector<16x4xf32>
    %90 = arith.mulf %87, %89 : vector<16x4xf32>
    %c0_45 = arith.constant 0 : index
    %c0_46 = arith.constant 0 : index
    %91 = vector.load %arg5[%c0_45, %c0_46] : memref<1x4xf32, #tpu.memory_space<vmem>>, vector<1x4xf32>
    %92 = vector.broadcast %91 : vector<1x4xf32> to vector<16x4xf32>
    %93 = arith.addf %90, %92 : vector<16x4xf32>
    %cst_47 = arith.constant 0.000000e+00 : f32
    %94 = vector.broadcast %cst_47 : f32 to vector<16x4xf32>
    %95 = arith.maximumf %93, %94 : vector<16x4xf32>
    %96 = tpu.iota {dimensions = array<i32: 0>} : vector<16x1xi32>
    %c15_i32_48 = arith.constant 15 : i32
    %97 = vector.broadcast %c15_i32_48 : i32 to vector<16x1xi32>
    %98 = arith.andi %96, %97 : vector<16x1xi32>
    %c0_i32_49 = arith.constant 0 : i32
    %99 = vector.broadcast %c0_i32_49 : i32 to vector<16x1xi32>
    %100 = arith.cmpi ne, %98, %99 : vector<16x1xi32>
    %c1_i32_50 = arith.constant 1 : i32
    %101 = tpu.dynamic_rotate %95 by %c1_i32_50 dim 0 : vector<16x4xf32>, i32 -> vector<16x4xf32>
    %cst_51 = arith.constant 0.000000e+00 : f32
    %102 = vector.shape_cast %100 : vector<16x1xi1> to vector<16x1xi1>
    %103 = vector.broadcast %102 : vector<16x1xi1> to vector<16x4xi1>
    %104 = vector.broadcast %cst_51 : f32 to vector<16x4xf32>
    %105 = arith.select %103, %101, %104 : vector<16x4xi1>, vector<16x4xf32>
    %c15_i32_52 = arith.constant 15 : i32
    %106 = vector.broadcast %c15_i32_52 : i32 to vector<16x1xi32>
    %107 = arith.cmpi ne, %98, %106 : vector<16x1xi32>
    %c15_i32_53 = arith.constant 15 : i32
    %108 = tpu.dynamic_rotate %95 by %c15_i32_53 dim 0 : vector<16x4xf32>, i32 -> vector<16x4xf32>
    %cst_54 = arith.constant 0.000000e+00 : f32
    %109 = vector.shape_cast %107 : vector<16x1xi1> to vector<16x1xi1>
    %110 = vector.broadcast %109 : vector<16x1xi1> to vector<16x4xi1>
    %111 = vector.broadcast %cst_54 : f32 to vector<16x4xf32>
    %112 = arith.select %110, %108, %111 : vector<16x4xi1>, vector<16x4xf32>
    %113 = tpu.concatenate %105, %95, %112 in 1 : vector<16x4xf32>, vector<16x4xf32>, vector<16x4xf32> -> vector<16x12xf32>
    %c1_i32_55 = arith.constant 1 : i32
    %114 = arith.cmpi slt, %arg1, %c1_i32_55 : i32
    %115 = arith.extui %114 : i1 to i32
    %116 = arith.sitofp %115 : i32 to f32
    %117 = vector.broadcast %116 : f32 to vector<16x12xf32>
    %118 = arith.mulf %113, %117 : vector<16x12xf32>
    %119 = arith.truncf %118 : vector<16x12xf32> to vector<16x12xbf16>
    %c144 = arith.constant 144 : index
    %c0_56 = arith.constant 0 : index
    %120 = vector.load %arg13[%c144, %c0_56] : memref<160x12xbf16, #tpu.memory_space<vmem>>, vector<16x12xbf16>
    tpu.vector_store %arg13[%c144, %c0_56], %119 {strides = array<i32>} : memref<160x12xbf16, #tpu.memory_space<vmem>>, vector<16x12xbf16>,
    %cst_57 = arith.constant 0.000000e+00 : f32
    %121 = vector.broadcast %cst_57 : f32 to vector<128x4xf32>
    %c0_58 = arith.constant 0 : index
    %c0_59 = arith.constant 0 : index
    %122 = vector.load %arg13[%c0_58, %c0_59] : memref<160x12xbf16, #tpu.memory_space<vmem>>, vector<128x12xbf16>
    %c0_60 = arith.constant 0 : index
    %c0_61 = arith.constant 0 : index
    %c0_62 = arith.constant 0 : index
    %123 = vector.load %arg6[%c0_60, %c0_61, %c0_62] : memref<3x12x4xbf16, #tpu.memory_space<vmem>>, vector<1x12x4xbf16>
    %124 = vector.shape_cast %123 : vector<1x12x4xbf16> to vector<12x4xbf16>
    %cst_63 = arith.constant dense<0.000000e+00> : vector<128x4xf32>
    %125 = tpu.matmul %122, %124, %cst_63 {dimension_numbers = #tpu.dot_dimension_numbers<[1], [0], [0], [1], [0, 0, 1, 1], [], []>} : vector<128x12xbf16>, vector<12x4xbf16>, vector<128x4xf32> -> vector<128x4xf32>
    %126 = arith.addf %121, %125 : vector<128x4xf32>
    %c16_64 = arith.constant 16 : index
    %c0_65 = arith.constant 0 : index
    %127 = vector.load %arg13[%c16_64, %c0_65] : memref<160x12xbf16, #tpu.memory_space<vmem>>, vector<128x12xbf16>
    %c1 = arith.constant 1 : index
    %c0_66 = arith.constant 0 : index
    %c0_67 = arith.constant 0 : index
    %128 = vector.load %arg6[%c1, %c0_66, %c0_67] : memref<3x12x4xbf16, #tpu.memory_space<vmem>>, vector<1x12x4xbf16>
    %129 = vector.shape_cast %128 : vector<1x12x4xbf16> to vector<12x4xbf16>
    %cst_68 = arith.constant dense<0.000000e+00> : vector<128x4xf32>
    %130 = tpu.matmul %127, %129, %cst_68 {dimension_numbers = #tpu.dot_dimension_numbers<[1], [0], [0], [1], [0, 0, 1, 1], [], []>} : vector<128x12xbf16>, vector<12x4xbf16>, vector<128x4xf32> -> vector<128x4xf32>
    %131 = arith.addf %126, %130 : vector<128x4xf32>
    %c32 = arith.constant 32 : index
    %c0_69 = arith.constant 0 : index
    %132 = vector.load %arg13[%c32, %c0_69] : memref<160x12xbf16, #tpu.memory_space<vmem>>, vector<128x12xbf16>
    %c2 = arith.constant 2 : index
    %c0_70 = arith.constant 0 : index
    %c0_71 = arith.constant 0 : index
    %133 = vector.load %arg6[%c2, %c0_70, %c0_71] : memref<3x12x4xbf16, #tpu.memory_space<vmem>>, vector<1x12x4xbf16>
    %134 = vector.shape_cast %133 : vector<1x12x4xbf16> to vector<12x4xbf16>
    %cst_72 = arith.constant dense<0.000000e+00> : vector<128x4xf32>
    %135 = tpu.matmul %132, %134, %cst_72 {dimension_numbers = #tpu.dot_dimension_numbers<[1], [0], [0], [1], [0, 0, 1, 1], [], []>} : vector<128x12xbf16>, vector<12x4xbf16>, vector<128x4xf32> -> vector<128x4xf32>
    %136 = arith.addf %131, %135 : vector<128x4xf32>
    %c0_73 = arith.constant 0 : index
    %c0_74 = arith.constant 0 : index
    %137 = vector.load %arg7[%c0_73, %c0_74] : memref<1x4xf32, #tpu.memory_space<vmem>>, vector<1x4xf32>
    %138 = vector.broadcast %137 : vector<1x4xf32> to vector<128x4xf32>
    %139 = arith.mulf %136, %138 : vector<128x4xf32>
    %c0_75 = arith.constant 0 : index
    %c0_76 = arith.constant 0 : index
    %140 = vector.load %arg8[%c0_75, %c0_76] : memref<1x4xf32, #tpu.memory_space<vmem>>, vector<1x4xf32>
    %141 = vector.broadcast %140 : vector<1x4xf32> to vector<128x4xf32>
    %142 = arith.addf %139, %141 : vector<128x4xf32>
    %cst_77 = arith.constant 0.000000e+00 : f32
    %143 = vector.broadcast %cst_77 : f32 to vector<128x4xf32>
    %144 = arith.maximumf %142, %143 : vector<128x4xf32>
    %145 = arith.truncf %144 : vector<128x4xf32> to vector<128x4xbf16>
    %c0_78 = arith.constant 0 : index
    %c0_79 = arith.constant 0 : index
    %146 = vector.load %arg9[%c0_78, %c0_79] : memref<4x16xbf16, #tpu.memory_space<vmem>>, vector<4x16xbf16>
    %cst_80 = arith.constant dense<0.000000e+00> : vector<128x16xf32>
    %147 = tpu.matmul %145, %146, %cst_80 {dimension_numbers = #tpu.dot_dimension_numbers<[1], [0], [0], [1], [0, 0, 1, 1], [], []>} : vector<128x4xbf16>, vector<4x16xbf16>, vector<128x16xf32> -> vector<128x16xf32>
    %c0_81 = arith.constant 0 : index
    %c0_82 = arith.constant 0 : index
    %148 = vector.load %arg10[%c0_81, %c0_82] : memref<1x16xf32, #tpu.memory_space<vmem>>, vector<1x16xf32>
    %149 = vector.broadcast %148 : vector<1x16xf32> to vector<128x16xf32>
    %150 = arith.mulf %147, %149 : vector<128x16xf32>
    %c0_83 = arith.constant 0 : index
    %c0_84 = arith.constant 0 : index
    %151 = vector.load %arg11[%c0_83, %c0_84] : memref<1x16xf32, #tpu.memory_space<vmem>>, vector<1x16xf32>
    %152 = vector.broadcast %151 : vector<1x16xf32> to vector<128x16xf32>
    %153 = arith.addf %150, %152 : vector<128x16xf32>
    %c0_85 = arith.constant 0 : index
    %154 = arith.index_cast %1 : i32 to index
    %c0_86 = arith.constant 0 : index
    %155 = vector.load %arg2[%c0_85, %154, %c0_86] : memref<1x256x16xbf16, #tpu.memory_space<vmem>>, vector<1x128x16xbf16>
    %156 = vector.shape_cast %155 : vector<1x128x16xbf16> to vector<128x16xbf16>
    %157 = arith.extf %156 : vector<128x16xbf16> to vector<128x16xf32>
    %158 = arith.addf %153, %157 : vector<128x16xf32>
    %cst_87 = arith.constant 0.000000e+00 : f32
    %159 = vector.broadcast %cst_87 : f32 to vector<128x16xf32>
    %160 = arith.maximumf %158, %159 : vector<128x16xf32>
    %161 = arith.truncf %160 : vector<128x16xf32> to vector<128x16xbf16>
    %c0_88 = arith.constant 0 : index
    %c0_89 = arith.constant 0 : index
    %c0_90 = arith.constant 0 : index
    %162 = vector.load %arg12[%c0_88, %c0_89, %c0_90] : memref<1x128x16xbf16, #tpu.memory_space<vmem>>, vector<1x128x16xbf16>
    %163 = vector.shape_cast %162 : vector<1x128x16xbf16> to vector<128x16xbf16>
    %164 = vector.shape_cast %161 : vector<128x16xbf16> to vector<1x128x16xbf16>
    tpu.vector_store %arg12[%c0_88, %c0_89, %c0_90], %164 {strides = array<i32>} : memref<1x128x16xbf16, #tpu.memory_space<vmem>>, vector<1x128x16xbf16>,
    return
  }
  func.func @transform_0(%arg0: i32, %arg1: i32) -> (i32, i32, i32) {
    %c0_i32 = arith.constant 0 : i32
    %c0_i32_0 = arith.constant 0 : i32
    %c0_i32_1 = arith.constant 0 : i32
    return %arg0, %c0_i32, %c0_i32_0 : i32, i32, i32
  }
  func.func @transform_1(%arg0: i32, %arg1: i32) -> (i32, i32) {
    %c0_i32 = arith.constant 0 : i32
    %c0_i32_0 = arith.constant 0 : i32
    %c0_i32_1 = arith.constant 0 : i32
    return %c0_i32, %c0_i32_0 : i32, i32
  }
  func.func @transform_2(%arg0: i32, %arg1: i32) -> (i32, i32) {
    %c0_i32 = arith.constant 0 : i32
    %c0_i32_0 = arith.constant 0 : i32
    %c0_i32_1 = arith.constant 0 : i32
    return %c0_i32, %c0_i32_0 : i32, i32
  }
  func.func @transform_3(%arg0: i32, %arg1: i32) -> (i32, i32) {
    %c0_i32 = arith.constant 0 : i32
    %c0_i32_0 = arith.constant 0 : i32
    %c0_i32_1 = arith.constant 0 : i32
    return %c0_i32, %c0_i32_0 : i32, i32
  }
  func.func @transform_4(%arg0: i32, %arg1: i32) -> (i32, i32, i32) {
    %c0_i32 = arith.constant 0 : i32
    %c0_i32_0 = arith.constant 0 : i32
    %c0_i32_1 = arith.constant 0 : i32
    %c0_i32_2 = arith.constant 0 : i32
    return %c0_i32, %c0_i32_0, %c0_i32_1 : i32, i32, i32
  }
  func.func @transform_5(%arg0: i32, %arg1: i32) -> (i32, i32) {
    %c0_i32 = arith.constant 0 : i32
    %c0_i32_0 = arith.constant 0 : i32
    %c0_i32_1 = arith.constant 0 : i32
    return %c0_i32, %c0_i32_0 : i32, i32
  }
  func.func @transform_6(%arg0: i32, %arg1: i32) -> (i32, i32) {
    %c0_i32 = arith.constant 0 : i32
    %c0_i32_0 = arith.constant 0 : i32
    %c0_i32_1 = arith.constant 0 : i32
    return %c0_i32, %c0_i32_0 : i32, i32
  }
  func.func @transform_7(%arg0: i32, %arg1: i32) -> (i32, i32) {
    %c0_i32 = arith.constant 0 : i32
    %c0_i32_0 = arith.constant 0 : i32
    %c0_i32_1 = arith.constant 0 : i32
    return %c0_i32, %c0_i32_0 : i32, i32
  }
  func.func @transform_8(%arg0: i32, %arg1: i32) -> (i32, i32) {
    %c0_i32 = arith.constant 0 : i32
    %c0_i32_0 = arith.constant 0 : i32
    %c0_i32_1 = arith.constant 0 : i32
    return %c0_i32, %c0_i32_0 : i32, i32
  }
  func.func @transform_9(%arg0: i32, %arg1: i32) -> (i32, i32) {
    %c0_i32 = arith.constant 0 : i32
    %c0_i32_0 = arith.constant 0 : i32
    %c0_i32_1 = arith.constant 0 : i32
    return %c0_i32, %c0_i32_0 : i32, i32
  }
  func.func @transform_10(%arg0: i32, %arg1: i32) -> (i32, i32, i32) {
    %c0_i32 = arith.constant 0 : i32
    %c0_i32_0 = arith.constant 0 : i32
    return %arg0, %arg1, %c0_i32 : i32, i32, i32
  }
}

</mosaic_0001>

<llo_original>
// kernel: tpu_custom_call.1
$region0: #{tpu_custom_call.1}
  #allocation0 [shape = 'u32[]', space=smem, size = 0x4, offset = 0x4, fixed_abs, tag = 'smem constant byte address 0x4 - core index']
  #allocation1 [shape = 'u32[144,128]{1,0:T(1,128)}', space=vmem, size = 0x12000, scoped, tag = 'internal scratch']
  #allocation2 [shape = 'bf16[160,12]{1,0:T(8,128)(2,1)}', space=vmem, size = 0xa000, scoped, tag = 'scratch operand']
  %s0 = inlined_call_operand.vmem [shape: bf16[2,256,16], index: 0, kind: input, shape index: {}]
  %s1 = inlined_call_operand.vmem [shape: bf16[16,4], index: 1, kind: input, shape index: {}]
  %s2 = inlined_call_operand.vmem [shape: f32[1,4], index: 2, kind: input, shape index: {}]
  %s3 = inlined_call_operand.vmem [shape: f32[1,4], index: 3, kind: input, shape index: {}]
  %s4 = inlined_call_operand.vmem [shape: bf16[3,12,4], index: 4, kind: input, shape index: {}]
  %s5 = inlined_call_operand.vmem [shape: f32[1,4], index: 5, kind: input, shape index: {}]
  %s6 = inlined_call_operand.vmem [shape: f32[1,4], index: 6, kind: input, shape index: {}]
  %s7 = inlined_call_operand.vmem [shape: bf16[4,16], index: 7, kind: input, shape index: {}]
  %s8 = inlined_call_operand.vmem [shape: f32[1,16], index: 8, kind: input, shape index: {}]
  %s9 = inlined_call_operand.vmem [shape: f32[1,16], index: 9, kind: input, shape index: {}]
  %s10 = inlined_call_operand.vmem [shape: bf16[2,256,16], index: 10, kind: output, shape index: {}]
  %s11 = sld [smem:[#allocation0]]
  $region73: #{tpu_custom_call.1} parent=0
    _
  %s13 = ssub.s32 1, %s11
  %s14 = scalar_select 0, %s13, %s11
  loop: start=0, step=1, limit=6
  $region2: #{tpu_custom_call.1} parent=0 // loop_pre_header
    _
  $region3: #{tpu_custom_call.1} parent=0 // loop_header
    %s16 = sphi 0, %s20
    %p17 = scmp.ge.s32.totalorder %s16, 6
    %s23 = sphi 0, %s35
    %s24 = sphi 0, %s31
    %s25 = sphi 0, %s23
    %s26 = sphi 0, %s24
    %s27 = sphi 0, %s25
    %s28 = sphi 0, %s26
    %s38 = sphi 0, %s40
    %s41 = sphi 0, %s38
    %s42 = sphi 0, %s41
    %s58 = sphi 0, %s42
    %s62 = sphi 0, %s62
    %s64 = sphi 0, %s62
    %s65 = sphi 0, %s64
    %s79 = sphi 0, %s65
    %s83 = sphi 0, %s83
    %s85 = sphi 0, %s83
    %s86 = sphi 0, %s85
    %s100 = sphi 0, %s86
    %s104 = sphi 0, %s104
    %s106 = sphi 0, %s104
    %s107 = sphi 0, %s106
    %s121 = sphi 0, %s107
    %s125 = sphi 0, %s125
    %s127 = sphi 0, %s125
    %s128 = sphi 0, %s127
    %s142 = sphi 0, %s128
    %s146 = sphi 0, %s146
    %s148 = sphi 0, %s146
    %s149 = sphi 0, %s148
    %s163 = sphi 0, %s149
    %s167 = sphi 0, %s167
    %s169 = sphi 0, %s167
    %s170 = sphi 0, %s169
    %s184 = sphi 0, %s170
    %s188 = sphi 0, %s188
    %s190 = sphi 0, %s188
    %s191 = sphi 0, %s190
    %s205 = sphi 0, %s191
    %s209 = sphi 0, %s209
    %s211 = sphi 0, %s209
    %s212 = sphi 0, %s211
    %s226 = sphi 0, %s212
    %s230 = sphi 0, %s230
    %s232 = sphi 0, %s230
    %s233 = sphi 0, %s232
    %s247 = sphi 0, %s233
    %s255 = sphi 0, %s257
    %s258 = sphi 0, %s255
    %s259 = sphi 0, %s258
    %s275 = sphi 0, %s259
  $region4: #{tpu_custom_call.1} parent=0 // loop_header_branch
    %19 = sbr.rel (%p17) target = $region8
  $region5: #{tpu_custom_call.1} parent=0 // loop_body
    %s21 = ssub.s32 %s16, 1
    %s22 = ssub.s32 %s16, 2
    %s29 = sadd.s32 1, %s24
    %p30 = scmp.ge.s32.totalorder %s29, 2
    %s31 = scalar_select %p30, 0, %s29
    %s32 = sadd.s32 1, %s23
    %s33 = scalar_select %p30, %s32, %s23
    %p34 = scmp.ge.s32.totalorder %s33, 2
    %s35 = scalar_select %p34, 0, %s33
    %s36 = ssub.s32 %s23, %s35
    %p37 = scmp.eq.s32.totalorder %s36, 0
    %s39 = sadd.s32 %s38, 1
    %s40 = scalar_select %p37, %s38, %s39
    %p43 = pneg %p37
    %p44 = scmp.eq.s32.totalorder %s16, 3
    %p45 = por %p43, %p44
    %p46 = scmp.ne.s32.totalorder %s38, %s41
    %p47 = scmp.eq.s32.totalorder %s16, 0
    %p48 = por %p46, %p47
    %p49 = scmp.ne.s32.totalorder %s38, %s41
    %p50 = scmp.eq.s32.totalorder %s21, 3
    %p51 = por %p49, %p50
    %p52 = scmp.ne.s32.totalorder %s41, %s42
    %p53 = scmp.eq.s32.totalorder %s21, 0
    %p54 = por %p52, %p53
    %p55 = scmp.ne.s32.totalorder %s41, %s42
    %p56 = scmp.eq.s32.totalorder %s22, 3
    %p57 = por %p55, %p56
    %p59 = scmp.ne.s32.totalorder %s42, %s58
    %p60 = scmp.eq.s32.totalorder %s22, 0
    %p61 = por %p59, %p60
    %s63 = sadd.s32 %s62, 1
    %p66 = scmp.eq.s32.totalorder %s16, 3
    %p67 = scmp.ne.s32.totalorder %s62, %s64
    %p68 = scmp.eq.s32.totalorder %s16, 0
    %p69 = por %p67, %p68
    %p70 = scmp.ne.s32.totalorder %s62, %s64
    %p71 = scmp.eq.s32.totalorder %s21, 3
    %p72 = por %p70, %p71
    %p73 = scmp.ne.s32.totalorder %s64, %s65
    %p74 = scmp.eq.s32.totalorder %s21, 0
    %p75 = por %p73, %p74
    %p76 = scmp.ne.s32.totalorder %s64, %s65
    %p77 = scmp.eq.s32.totalorder %s22, 3
    %p78 = por %p76, %p77
    %p80 = scmp.ne.s32.totalorder %s65, %s79
    %p81 = scmp.eq.s32.totalorder %s22, 0
    %p82 = por %p80, %p81
    %s84 = sadd.s32 %s83, 1
    %p87 = scmp.eq.s32.totalorder %s16, 3
    %p88 = scmp.ne.s32.totalorder %s83, %s85
    %p89 = scmp.eq.s32.totalorder %s16, 0
    %p90 = por %p88, %p89
    %p91 = scmp.ne.s32.totalorder %s83, %s85
    %p92 = scmp.eq.s32.totalorder %s21, 3
    %p93 = por %p91, %p92
    %p94 = scmp.ne.s32.totalorder %s85, %s86
    %p95 = scmp.eq.s32.totalorder %s21, 0
    %p96 = por %p94, %p95
    %p97 = scmp.ne.s32.totalorder %s85, %s86
    %p98 = scmp.eq.s32.totalorder %s22, 3
    %p99 = por %p97, %p98
    %p101 = scmp.ne.s32.totalorder %s86, %s100
    %p102 = scmp.eq.s32.totalorder %s22, 0
    %p103 = por %p101, %p102
    %s105 = sadd.s32 %s104, 1
    %p108 = scmp.eq.s32.totalorder %s16, 3
    %p109 = scmp.ne.s32.totalorder %s104, %s106
    %p110 = scmp.eq.s32.totalorder %s16, 0
    %p111 = por %p109, %p110
    %p112 = scmp.ne.s32.totalorder %s104, %s106
    %p113 = scmp.eq.s32.totalorder %s21, 3
    %p114 = por %p112, %p113
    %p115 = scmp.ne.s32.totalorder %s106, %s107
    %p116 = scmp.eq.s32.totalorder %s21, 0
    %p117 = por %p115, %p116
    %p118 = scmp.ne.s32.totalorder %s106, %s107
    %p119 = scmp.eq.s32.totalorder %s22, 3
    %p120 = por %p118, %p119
    %p122 = scmp.ne.s32.totalorder %s107, %s121
    %p123 = scmp.eq.s32.totalorder %s22, 0
    %p124 = por %p122, %p123
    %s126 = sadd.s32 %s125, 1
    %p129 = scmp.eq.s32.totalorder %s16, 3
    %p130 = scmp.ne.s32.totalorder %s125, %s127
    %p131 = scmp.eq.s32.totalorder %s16, 0
    %p132 = por %p130, %p131
    %p133 = scmp.ne.s32.totalorder %s125, %s127
    %p134 = scmp.eq.s32.totalorder %s21, 3
    %p135 = por %p133, %p134
    %p136 = scmp.ne.s32.totalorder %s127, %s128
    %p137 = scmp.eq.s32.totalorder %s21, 0
    %p138 = por %p136, %p137
    %p139 = scmp.ne.s32.totalorder %s127, %s128
    %p140 = scmp.eq.s32.totalorder %s22, 3
    %p141 = por %p139, %p140
    %p143 = scmp.ne.s32.totalorder %s128, %s142
    %p144 = scmp.eq.s32.totalorder %s22, 0
    %p145 = por %p143, %p144
    %s147 = sadd.s32 %s146, 1
    %p150 = scmp.eq.s32.totalorder %s16, 3
    %p151 = scmp.ne.s32.totalorder %s146, %s148
    %p152 = scmp.eq.s32.totalorder %s16, 0
    %p153 = por %p151, %p152
    %p154 = scmp.ne.s32.totalorder %s146, %s148
    %p155 = scmp.eq.s32.totalorder %s21, 3
    %p156 = por %p154, %p155
    %p157 = scmp.ne.s32.totalorder %s148, %s149
    %p158 = scmp.eq.s32.totalorder %s21, 0
    %p159 = por %p157, %p158
    %p160 = scmp.ne.s32.totalorder %s148, %s149
    %p161 = scmp.eq.s32.totalorder %s22, 3
    %p162 = por %p160, %p161
    %p164 = scmp.ne.s32.totalorder %s149, %s163
    %p165 = scmp.eq.s32.totalorder %s22, 0
    %p166 = por %p164, %p165
    %s168 = sadd.s32 %s167, 1
    %p171 = scmp.eq.s32.totalorder %s16, 3
    %p172 = scmp.ne.s32.totalorder %s167, %s169
    %p173 = scmp.eq.s32.totalorder %s16, 0
    %p174 = por %p172, %p173
    %p175 = scmp.ne.s32.totalorder %s167, %s169
    %p176 = scmp.eq.s32.totalorder %s21, 3
    %p177 = por %p175, %p176
    %p178 = scmp.ne.s32.totalorder %s169, %s170
    %p179 = scmp.eq.s32.totalorder %s21, 0
    %p180 = por %p178, %p179
    %p181 = scmp.ne.s32.totalorder %s169, %s170
    %p182 = scmp.eq.s32.totalorder %s22, 3
    %p183 = por %p181, %p182
    %p185 = scmp.ne.s32.totalorder %s170, %s184
    %p186 = scmp.eq.s32.totalorder %s22, 0
    %p187 = por %p185, %p186
    %s189 = sadd.s32 %s188, 1
    %p192 = scmp.eq.s32.totalorder %s16, 3
    %p193 = scmp.ne.s32.totalorder %s188, %s190
    %p194 = scmp.eq.s32.totalorder %s16, 0
    %p195 = por %p193, %p194
    %p196 = scmp.ne.s32.totalorder %s188, %s190
    %p197 = scmp.eq.s32.totalorder %s21, 3
    %p198 = por %p196, %p197
    %p199 = scmp.ne.s32.totalorder %s190, %s191
    %p200 = scmp.eq.s32.totalorder %s21, 0
    %p201 = por %p199, %p200
    %p202 = scmp.ne.s32.totalorder %s190, %s191
    %p203 = scmp.eq.s32.totalorder %s22, 3
    %p204 = por %p202, %p203
    %p206 = scmp.ne.s32.totalorder %s191, %s205
    %p207 = scmp.eq.s32.totalorder %s22, 0
    %p208 = por %p206, %p207
    %s210 = sadd.s32 %s209, 1
    %p213 = scmp.eq.s32.totalorder %s16, 3
    %p214 = scmp.ne.s32.totalorder %s209, %s211
    %p215 = scmp.eq.s32.totalorder %s16, 0
    %p216 = por %p214, %p215
    %p217 = scmp.ne.s32.totalorder %s209, %s211
    %p218 = scmp.eq.s32.totalorder %s21, 3
    %p219 = por %p217, %p218
    %p220 = scmp.ne.s32.totalorder %s211, %s212
    %p221 = scmp.eq.s32.totalorder %s21, 0
    %p222 = por %p220, %p221
    %p223 = scmp.ne.s32.totalorder %s211, %s212
    %p224 = scmp.eq.s32.totalorder %s22, 3
    %p225 = por %p223, %p224
    %p227 = scmp.ne.s32.totalorder %s212, %s226
    %p228 = scmp.eq.s32.totalorder %s22, 0
    %p229 = por %p227, %p228
    %s231 = sadd.s32 %s230, 1
    %p234 = scmp.eq.s32.totalorder %s16, 3
    %p235 = scmp.ne.s32.totalorder %s230, %s232
    %p236 = scmp.eq.s32.totalorder %s16, 0
    %p237 = por %p235, %p236
    %p238 = scmp.ne.s32.totalorder %s230, %s232
    %p239 = scmp.eq.s32.totalorder %s21, 3
    %p240 = por %p238, %p239
    %p241 = scmp.ne.s32.totalorder %s232, %s233
    %p242 = scmp.eq.s32.totalorder %s21, 0
    %p243 = por %p241, %p242
    %p244 = scmp.ne.s32.totalorder %s232, %s233
    %p245 = scmp.eq.s32.totalorder %s22, 3
    %p246 = por %p244, %p245
    %p248 = scmp.ne.s32.totalorder %s233, %s247
    %p249 = scmp.eq.s32.totalorder %s22, 0
    %p250 = por %p248, %p249
    %s251 = ssub.s32 %s23, %s35
    %s252 = ssub.s32 %s24, %s31
    %s253 = sor.u32 %s251, %s252
    %p254 = scmp.eq.s32.totalorder %s253, 0
    %s256 = sadd.s32 %s255, 1
    %s257 = scalar_select %p254, %s255, %s256
    %p260 = pneg %p254
    %p261 = scmp.eq.s32.totalorder %s16, 3
    %p262 = por %p260, %p261
    %p263 = scmp.ne.s32.totalorder %s255, %s258
    %p264 = scmp.eq.s32.totalorder %s16, 0
    %p265 = por %p263, %p264
    %p266 = scmp.ne.s32.totalorder %s255, %s258
    %p267 = scmp.eq.s32.totalorder %s21, 3
    %p268 = por %p266, %p267
    %p269 = scmp.ne.s32.totalorder %s258, %s259
    %p270 = scmp.eq.s32.totalorder %s21, 0
    %p271 = por %p269, %p270
    %p272 = scmp.ne.s32.totalorder %s258, %s259
    %p273 = scmp.eq.s32.totalorder %s22, 3
    %p274 = por %p272, %p273
    %p276 = scmp.ne.s32.totalorder %s259, %s275
    %p277 = scmp.eq.s32.totalorder %s22, 0
    %p278 = por %p276, %p277
    %p279 = scmp.le.s32.totalorder 1, %s16
    %p280 = scmp.lt.s32.totalorder %s16, 5
    %p281 = pnand %p279, %p280
    %p282 = pneg %p281
    // Predicated region
    $region9: #{tpu_custom_call.1} parent=5 // pred_check
      _
    $region10: #{tpu_custom_call.1} parent=5 // pred_check_branch
      %284 = sbr.rel (%p281) target = $region12
    $region11: #{tpu_custom_call.1} parent=5 // pred_region
      %s285 = ssub.s32 %s16, 1
      // Predicated region
      $region13: #{tpu_custom_call.1} parent=11 // pred_check
        %p286 = pneg %p75
      $region14: #{tpu_custom_call.1} parent=11 // pred_check_branch
        %288 = sbr.rel (%p286) target = $region16
      $region15: #{tpu_custom_call.1} parent=11 // pred_region
        _
      $region16: #{tpu_custom_call.1} parent=11 // pred_fallthru
        _
      // Predicated region
      $region17: #{tpu_custom_call.1} parent=11 // pred_check
        %p289 = pneg %p96
      $region18: #{tpu_custom_call.1} parent=11 // pred_check_branch
        %291 = sbr.rel (%p289) target = $region20
      $region19: #{tpu_custom_call.1} parent=11 // pred_region
        _
      $region20: #{tpu_custom_call.1} parent=11 // pred_fallthru
        _
      // Predicated region
      $region21: #{tpu_custom_call.1} parent=11 // pred_check
        %p292 = pneg %p117
      $region22: #{tpu_custom_call.1} parent=11 // pred_check_branch
        %294 = sbr.rel (%p292) target = $region24
      $region23: #{tpu_custom_call.1} parent=11 // pred_region
        _
      $region24: #{tpu_custom_call.1} parent=11 // pred_fallthru
        _
      // Predicated region
      $region25: #{tpu_custom_call.1} parent=11 // pred_check
        %p295 = pneg %p138
      $region26: #{tpu_custom_call.1} parent=11 // pred_check_branch
        %297 = sbr.rel (%p295) target = $region28
      $region27: #{tpu_custom_call.1} parent=11 // pred_region
        _
      $region28: #{tpu_custom_call.1} parent=11 // pred_fallthru
        _
      // Predicated region
      $region29: #{tpu_custom_call.1} parent=11 // pred_check
        %p298 = pneg %p159
      $region30: #{tpu_custom_call.1} parent=11 // pred_check_branch
        %300 = sbr.rel (%p298) target = $region32
      $region31: #{tpu_custom_call.1} parent=11 // pred_region
        _
      $region32: #{tpu_custom_call.1} parent=11 // pred_fallthru
        _
      // Predicated region
      $region33: #{tpu_custom_call.1} parent=11 // pred_check
        %p301 = pneg %p180
      $region34: #{tpu_custom_call.1} parent=11 // pred_check_branch
        %303 = sbr.rel (%p301) target = $region36
      $region35: #{tpu_custom_call.1} parent=11 // pred_region
        _
      $region36: #{tpu_custom_call.1} parent=11 // pred_fallthru
        _
      // Predicated region
      $region37: #{tpu_custom_call.1} parent=11 // pred_check
        %p304 = pneg %p201
      $region38: #{tpu_custom_call.1} parent=11 // pred_check_branch
        %306 = sbr.rel (%p304) target = $region40
      $region39: #{tpu_custom_call.1} parent=11 // pred_region
        _
      $region40: #{tpu_custom_call.1} parent=11 // pred_fallthru
        _
      // Predicated region
      $region41: #{tpu_custom_call.1} parent=11 // pred_check
        %p307 = pneg %p222
      $region42: #{tpu_custom_call.1} parent=11 // pred_check_branch
        %309 = sbr.rel (%p307) target = $region44
      $region43: #{tpu_custom_call.1} parent=11 // pred_region
        _
      $region44: #{tpu_custom_call.1} parent=11 // pred_fallthru
        _
      // Predicated region
      $region45: #{tpu_custom_call.1} parent=11 // pred_check
        %p310 = pneg %p243
      $region46: #{tpu_custom_call.1} parent=11 // pred_check_branch
        %312 = sbr.rel (%p310) target = $region48
      $region47: #{tpu_custom_call.1} parent=11 // pred_region
        _
      $region48: #{tpu_custom_call.1} parent=11 // pred_fallthru
        _
    $region12: #{tpu_custom_call.1} parent=5 // pred_fallthru
      _
    %p313 = scmp.lt.s32.totalorder %s16, 4
    // Predicated region
    $region49: #{tpu_custom_call.1} parent=5 // pred_check
      %p314 = pneg %p313
    $region50: #{tpu_custom_call.1} parent=5 // pred_check_branch
      %316 = sbr.rel (%p314) target = $region52
    $region51: #{tpu_custom_call.1} parent=5 // pred_region
      // Predicated region
      $region53: #{tpu_custom_call.1} parent=51 // pred_check
        %p317 = pneg %p48
      $region54: #{tpu_custom_call.1} parent=51 // pred_check_branch
        %319 = sbr.rel (%p317) target = $region56
      $region55: #{tpu_custom_call.1} parent=51 // pred_region
        %p320 = scmp.lt.s32.totalorder %s23, 1
        %s321 = scalar_select %p320, %s23, 1
        %s322 = smul.addr %s321, 32
        %s323 = smul.addr %s322, 4
        %s324 = scalar_lea.vmem %s0, %s323
      $region56: #{tpu_custom_call.1} parent=51 // pred_fallthru
        _
    $region52: #{tpu_custom_call.1} parent=5 // pred_fallthru
      _
    %p325 = scmp.le.s32.totalorder 1, %s16
    %p326 = scmp.lt.s32.totalorder %s16, 5
    %p327 = pnand %p325, %p326
    %p328 = pneg %p327
    // Predicated region
    $region57: #{tpu_custom_call.1} parent=5 // pred_check
      _
    $region58: #{tpu_custom_call.1} parent=5 // pred_check_branch
      %330 = sbr.rel (%p327) target = $region60
    $region59: #{tpu_custom_call.1} parent=5 // pred_region
      %s331 = ssub.s32 %s16, 1
      %p332 = scmp.lt.s32.totalorder %s25, 1
      %s333 = scalar_select %p332, %s25, 1
      %s334 = smul.addr %s333, 32
      %s335 = smul.addr %s334, 4
      %s336 = scalar_lea.vmem %s0, %s335
      %p337 = pneg %p54
      %p338 = pneg %p51
      %p339 = pneg %p75
      %p340 = pneg %p72
      %p341 = pneg %p96
      %p342 = pneg %p93
      %p343 = pneg %p117
      %p344 = pneg %p114
      %p345 = pneg %p138
      %p346 = pneg %p135
      %p347 = pneg %p159
      %p348 = pneg %p156
      %p349 = pneg %p180
      %p350 = pneg %p177
      %p351 = pneg %p201
      %p352 = pneg %p198
      %p353 = pneg %p222
      %p354 = pneg %p219
      %p355 = pneg %p243
      %p356 = pneg %p240
      %p357 = pneg %p271
      %p358 = pneg %p268
      %s359 = smul.u32 16, %s26
      %p360 = scmp.lt.s32.totalorder %s25, 1
      %s361 = scalar_select %p360, %s25, 1
      %p362 = scmp.lt.s32.totalorder %s359, 31
      %s363 = scalar_select %p362, %s359, 31
      %s364 = smul.addr %s361, 32
      %s365 = sadd.s32 %s363, %s364
      %s366 = smul.addr %s365, 4
      %s367 = scalar_lea.vmem %s10, %s366
      %p368 = scmp.lt.s32.totalorder %s25, 1
      %s369 = scalar_select %p368, %s25, 1
      %s370 = smul.addr %s369, 32
      %s371 = smul.addr %s370, 4
      %s372 = scalar_lea.vmem %s0, %s371
      %s373 = smul.u32 16, %s26
      %p374 = scmp.lt.s32.totalorder %s25, 1
      %s375 = scalar_select %p374, %s25, 1
      %p376 = scmp.lt.s32.totalorder %s373, 31
      %s377 = scalar_select %p376, %s373, 31
      %s378 = smul.addr %s375, 32
      %s379 = sadd.s32 %s377, %s378
      %s380 = smul.addr %s379, 4
      %s381 = scalar_lea.vmem %s10, %s380
      %s382 = smul.u32 16, %s26
      %s384 = smul.u32 %s26, 128
      %s385 = sshra.s32 %s384, 3
      %s386 = sand.u32 %s384, 7
      %s387 = smul.addr %s385, 4
      %s388 = scalar_lea.vmem %s372, %s387
      %v389 = vld [vmem:[%s388] sm:$0xf]
      %v390 = vld [vmem:[%s388 + $0x4] sm:$0xf]
      %v391 = vld [vmem:[%s388 + $0x8] sm:$0xf]
      %v392 = vld [vmem:[%s388 + $0xc] sm:$0xf]
      %v393 = vld [vmem:[%s388 + $0x10] sm:$0xf]
      %v394 = vld [vmem:[%s388 + $0x14] sm:$0xf]
      %v395 = vld [vmem:[%s388 + $0x18] sm:$0xf]
      %v396 = vld [vmem:[%s388 + $0x1c] sm:$0xf]
      %v397 = vld [vmem:[%s388 + $0x20] sm:$0xf]
      %v398 = vld [vmem:[%s388 + $0x24] sm:$0xf]
      %v399 = vld [vmem:[%s388 + $0x28] sm:$0xf]
      %v400 = vld [vmem:[%s388 + $0x2c] sm:$0xf]
      %v401 = vld [vmem:[%s388 + $0x30] sm:$0xf]
      %v402 = vld [vmem:[%s388 + $0x34] sm:$0xf]
      %v403 = vld [vmem:[%s388 + $0x38] sm:$0xf]
      %v404 = vld [vmem:[%s388 + $0x3c] sm:$0xf]
      %v405 = vld [vmem:[%s1] sm:$0xf]
      %v406 = vld [vmem:[%s1 + $0x4] sm:$0xf]
      %v423 = vunpack.c.l.b16 %v389
      %v424 = vunpack.c.l.b16 %v390
      %v425 = vunpack.c.l.b16 %v391
      %v426 = vunpack.c.l.b16 %v392
      %v427 = vunpack.c.l.b16 %v393
      %v428 = vunpack.c.l.b16 %v394
      %v429 = vunpack.c.l.b16 %v395
      %v430 = vunpack.c.l.b16 %v396
      %v431 = vunpack.c.l.b16 %v397
      %v432 = vunpack.c.l.b16 %v398
      %v433 = vunpack.c.l.b16 %v399
      %v434 = vunpack.c.l.b16 %v400
      %v435 = vunpack.c.l.b16 %v401
      %v436 = vunpack.c.l.b16 %v402
      %v437 = vunpack.c.l.b16 %v403
      %v438 = vunpack.c.l.b16 %v404
      %v439 = vpack.c.b16 %v424, %v423
      %v440 = vpack.c.b16 %v426, %v425
      %v441 = vpack.c.b16 %v428, %v427
      %v442 = vpack.c.b16 %v430, %v429
      %v443 = vpack.c.b16 %v432, %v431
      %v444 = vpack.c.b16 %v434, %v433
      %v445 = vpack.c.b16 %v436, %v435
      %v446 = vpack.c.b16 %v438, %v437
      %v449 = vunpack.c.l.b16 %v405
      %v450 = vunpack.c.l.b16 %v406
      %v451 = vpack.c.b16 %v450, %v449
      %vm453 = vcmask 130048
      %v455 = vsel %vm453, %v439, 0
      %v458 = vsel %vm453, %v440, 0
      %v461 = vsel %vm453, %v441, 0
      %v464 = vsel %vm453, %v442, 0
      %v467 = vsel %vm453, %v443, 0
      %v470 = vsel %vm453, %v444, 0
      %v473 = vsel %vm453, %v445, 0
      %v476 = vsel %vm453, %v446, 0
      %478 = vmatprep.subr.bf16.mxu0 0
      %479 = vmatpush1.bf16.msra.mxu0 0
      %480 = vmatprep.subr.bf16.mxu0 0
      %481 = vmatpush1.bf16.msra.mxu0 0
      %482 = vmatprep.subr.bf16.mxu0 0
      %483 = vmatpush1.bf16.msra.mxu0 0
      %484 = vmatprep.subr.bf16.mxu0 0
      %485 = vmatpush1.bf16.msra.mxu0 0
      %486 = vmatprep.subr.bf16.mxu0 0
      %487 = vmatpush1.bf16.msra.mxu0 0
      %488 = vmatprep.subr.bf16.mxu0 0
      %489 = vmatpush1.bf16.msra.mxu0 0
      %490 = vmatprep.subr.bf16.mxu0 0
      %491 = vmatpush1.bf16.msra.mxu0 0
      %492 = vmatprep.subr.bf16.mxu0 0
      %493 = vmatpush1.bf16.msra.mxu0 %v451
      %494 = vmatprep.subr.bf16.mxu0 0
      %495 = vmatpush2.bf16.msra.mxu0 0
      %496 = vmatprep.subr.bf16.mxu0 0
      %497 = vmatpush2.bf16.msra.mxu0 0
      %498 = vmatprep.subr.bf16.mxu0 0
      %499 = vmatpush2.bf16.msra.mxu0 0
      %500 = vmatprep.subr.bf16.mxu0 0
      %501 = vmatpush2.bf16.msra.mxu0 0
      %502 = vmatprep.subr.bf16.mxu0 0
      %503 = vmatpush2.bf16.msra.mxu0 0
      %504 = vmatprep.subr.bf16.mxu0 0
      %505 = vmatpush2.bf16.msra.mxu0 0
      %506 = vmatprep.subr.bf16.mxu0 0
      %507 = vmatpush2.bf16.msra.mxu0 0
      %508 = vmatprep.subr.bf16.mxu0 0
      %509 = vmatpush2.bf16.msra.mxu0 0
      %510 = vmatprep.mubr.bf16.mxu0 0
      %511 = vmatmul.mubr.bf16.gmra.mxu0 %v455
      %v512 = vpop.f32.mrf.mxu0
      %v513 = vadd.f32 0.0, %v512
      %v514 = vpop.f32.mrf.mxu0
      %v515 = vpop.f32.mrf.mxu0
      %v516 = vadd.f32 0.0, %v515
      %v517 = vpop.f32.mrf.mxu0
      %518 = vmatprep.mubr.bf16.mxu0 0
      %519 = vmatmul.mubr.bf16.gmra.mxu0 %v458
      %v520 = vpop.f32.mrf.mxu0
      %v521 = vadd.f32 0.0, %v520
      %v522 = vpop.f32.mrf.mxu0
      %v523 = vpop.f32.mrf.mxu0
      %v524 = vadd.f32 0.0, %v523
      %v525 = vpop.f32.mrf.mxu0
      %526 = vmatprep.mubr.bf16.mxu0 0
      %527 = vmatmul.mubr.bf16.gmra.mxu0 %v461
      %v528 = vpop.f32.mrf.mxu0
      %v529 = vadd.f32 0.0, %v528
      %v530 = vpop.f32.mrf.mxu0
      %v531 = vpop.f32.mrf.mxu0
      %v532 = vadd.f32 0.0, %v531
      %v533 = vpop.f32.mrf.mxu0
      %534 = vmatprep.mubr.bf16.mxu0 0
      %535 = vmatmul.mubr.bf16.gmra.mxu0 %v464
      %v536 = vpop.f32.mrf.mxu0
      %v537 = vadd.f32 0.0, %v536
      %v538 = vpop.f32.mrf.mxu0
      %v539 = vpop.f32.mrf.mxu0
      %v540 = vadd.f32 0.0, %v539
      %v541 = vpop.f32.mrf.mxu0
      %542 = vmatprep.mubr.bf16.mxu0 0
      %543 = vmatmul.mubr.bf16.gmra.mxu0 %v467
      %v544 = vpop.f32.mrf.mxu0
      %v545 = vadd.f32 0.0, %v544
      %v546 = vpop.f32.mrf.mxu0
      %v547 = vpop.f32.mrf.mxu0
      %v548 = vadd.f32 0.0, %v547
      %v549 = vpop.f32.mrf.mxu0
      %550 = vmatprep.mubr.bf16.mxu0 0
      %551 = vmatmul.mubr.bf16.gmra.mxu0 %v470
      %v552 = vpop.f32.mrf.mxu0
      %v553 = vadd.f32 0.0, %v552
      %v554 = vpop.f32.mrf.mxu0
      %v555 = vpop.f32.mrf.mxu0
      %v556 = vadd.f32 0.0, %v555
      %v557 = vpop.f32.mrf.mxu0
      %558 = vmatprep.mubr.bf16.mxu0 0
      %559 = vmatmul.mubr.bf16.gmra.mxu0 %v473
      %v560 = vpop.f32.mrf.mxu0
      %v561 = vadd.f32 0.0, %v560
      %v562 = vpop.f32.mrf.mxu0
      %v563 = vpop.f32.mrf.mxu0
      %v564 = vadd.f32 0.0, %v563
      %v565 = vpop.f32.mrf.mxu0
      %566 = vmatprep.mubr.bf16.mxu0 0
      %567 = vmatmul.mubr.bf16.gmra.mxu0 %v476
      %v568 = vpop.f32.mrf.mxu0
      %v569 = vadd.f32 0.0, %v568
      %v570 = vpop.f32.mrf.mxu0
      %v571 = vpop.f32.mrf.mxu0
      %v572 = vadd.f32 0.0, %v571
      %v573 = vpop.f32.mrf.mxu0
      %574 = vdwg.mxu0
      %v575 = vld [vmem:[%s2] sm:$0x1]
      %v577 = vlaneseq
      %v578 = vshrl.u32 %v577, 7
      %v579 = vsub.s32 0, %v578
      %v580 = vrot.slane %v575, %v579
      %v582 = vmul.f32 %v513, %v580
      %v583 = vmul.f32 %v516, %v580
      %v584 = vmul.f32 %v521, %v580
      %v585 = vmul.f32 %v524, %v580
      %v586 = vmul.f32 %v529, %v580
      %v587 = vmul.f32 %v532, %v580
      %v588 = vmul.f32 %v537, %v580
      %v589 = vmul.f32 %v540, %v580
      %v590 = vmul.f32 %v545, %v580
      %v591 = vmul.f32 %v548, %v580
      %v592 = vmul.f32 %v553, %v580
      %v593 = vmul.f32 %v556, %v580
      %v594 = vmul.f32 %v561, %v580
      %v595 = vmul.f32 %v564, %v580
      %v596 = vmul.f32 %v569, %v580
      %v597 = vmul.f32 %v572, %v580
      %v598 = vld [vmem:[%s3] sm:$0x1]
      %v600 = vlaneseq
      %v601 = vshrl.u32 %v600, 7
      %v602 = vsub.s32 0, %v601
      %v603 = vrot.slane %v598, %v602
      %v605 = vadd.f32 %v582, %v603
      %v606 = vadd.f32 %v583, %v603
      %v607 = vadd.f32 %v584, %v603
      %v608 = vadd.f32 %v585, %v603
      %v609 = vadd.f32 %v586, %v603
      %v610 = vadd.f32 %v587, %v603
      %v611 = vadd.f32 %v588, %v603
      %v612 = vadd.f32 %v589, %v603
      %v613 = vadd.f32 %v590, %v603
      %v614 = vadd.f32 %v591, %v603
      %v615 = vadd.f32 %v592, %v603
      %v616 = vadd.f32 %v593, %v603
      %v617 = vadd.f32 %v594, %v603
      %v618 = vadd.f32 %v595, %v603
      %v619 = vadd.f32 %v596, %v603
      %v620 = vadd.f32 %v597, %v603
      %v621 = vmax.f32 %v605, 0.0
      %v622 = vmax.f32 %v606, 0.0
      %v623 = vmax.f32 %v607, 0.0
      %v624 = vmax.f32 %v608, 0.0
      %v625 = vmax.f32 %v609, 0.0
      %v626 = vmax.f32 %v610, 0.0
      %v627 = vmax.f32 %v611, 0.0
      %v628 = vmax.f32 %v612, 0.0
      %v629 = vmax.f32 %v613, 0.0
      %v630 = vmax.f32 %v614, 0.0
      %v631 = vmax.f32 %v615, 0.0
      %v632 = vmax.f32 %v616, 0.0
      %v633 = vmax.f32 %v617, 0.0
      %v634 = vmax.f32 %v618, 0.0
      %v635 = vmax.f32 %v619, 0.0
      %v636 = vmax.f32 %v620, 0.0
      %v637 = vlaneseq
      %v638 = vshrl.u32 %v637, 7
      %v639 = vadd.s32 %v638, 8
      %v640 = vadd.s32 %v638, 16
      %v641 = vadd.s32 %v638, 24
      %v642 = vadd.s32 %v638, 32
      %v643 = vadd.s32 %v638, 40
      %v644 = vadd.s32 %v638, 48
      %v645 = vadd.s32 %v638, 56
      %v646 = vadd.s32 %v638, 64
      %v647 = vadd.s32 %v638, 72
      %v648 = vadd.s32 %v638, 80
      %v649 = vadd.s32 %v638, 88
      %v650 = vadd.s32 %v638, 96
      %v651 = vadd.s32 %v638, 104
      %v652 = vadd.s32 %v638, 112
      %v653 = vadd.s32 %v638, 120
      %v654 = vand.u32 %v638, 15
      %v655 = vand.u32 %v639, 15
      %v656 = vand.u32 %v640, 15
      %v657 = vand.u32 %v641, 15
      %v658 = vand.u32 %v642, 15
      %v659 = vand.u32 %v643, 15
      %v660 = vand.u32 %v644, 15
      %v661 = vand.u32 %v645, 15
      %v662 = vand.u32 %v646, 15
      %v663 = vand.u32 %v647, 15
      %v664 = vand.u32 %v648, 15
      %v665 = vand.u32 %v649, 15
      %v666 = vand.u32 %v650, 15
      %v667 = vand.u32 %v651, 15
      %v668 = vand.u32 %v652, 15
      %v669 = vand.u32 %v653, 15
      %vm670 = vcmp.ne.s32.totalorder %v654, 0
      %vm671 = vcmp.ne.s32.totalorder %v655, 0
      %vm672 = vcmp.ne.s32.totalorder %v656, 0
      %vm673 = vcmp.ne.s32.totalorder %v657, 0
      %vm674 = vcmp.ne.s32.totalorder %v658, 0
      %vm675 = vcmp.ne.s32.totalorder %v659, 0
      %vm676 = vcmp.ne.s32.totalorder %v660, 0
      %vm677 = vcmp.ne.s32.totalorder %v661, 0
      %vm678 = vcmp.ne.s32.totalorder %v662, 0
      %vm679 = vcmp.ne.s32.totalorder %v663, 0
      %vm680 = vcmp.ne.s32.totalorder %v664, 0
      %vm681 = vcmp.ne.s32.totalorder %v665, 0
      %vm682 = vcmp.ne.s32.totalorder %v666, 0
      %vm683 = vcmp.ne.s32.totalorder %v667, 0
      %vm684 = vcmp.ne.s32.totalorder %v668, 0
      %vm685 = vcmp.ne.s32.totalorder %v669, 0
      %v686 = vrot.slane %v621, 7
      %v687 = vrot.slane %v622, 7
      %v688 = vrot.slane %v623, 7
      %v689 = vrot.slane %v624, 7
      %v690 = vrot.slane %v625, 7
      %v691 = vrot.slane %v626, 7
      %v692 = vrot.slane %v627, 7
      %v693 = vrot.slane %v628, 7
      %v694 = vrot.slane %v629, 7
      %v695 = vrot.slane %v630, 7
      %v696 = vrot.slane %v631, 7
      %v697 = vrot.slane %v632, 7
      %v698 = vrot.slane %v633, 7
      %v699 = vrot.slane %v634, 7
      %v700 = vrot.slane %v635, 7
      %v701 = vrot.slane %v636, 7
      %vm702 = vcmp.lt.s32.totalorder %v638, 1
      %v703 = vsel %vm702, %v700, %v701
      %v704 = vsel %vm702, %v699, %v700
      %v705 = vsel %vm702, %v698, %v699
      %v706 = vsel %vm702, %v697, %v698
      %v707 = vsel %vm702, %v696, %v697
      %v708 = vsel %vm702, %v695, %v696
      %v709 = vsel %vm702, %v694, %v695
      %v710 = vsel %vm702, %v693, %v694
      %v711 = vsel %vm702, %v692, %v693
      %v712 = vsel %vm702, %v691, %v692
      %v713 = vsel %vm702, %v690, %v691
      %v714 = vsel %vm702, %v689, %v690
      %v715 = vsel %vm702, %v688, %v689
      %v716 = vsel %vm702, %v687, %v688
      %v717 = vsel %vm702, %v686, %v687
      %v718 = vsel %vm702, %v701, %v686
      %v719 = vsel %vm670, 1, 0
      %v720 = vsel %vm671, 1, 0
      %v721 = vsel %vm672, 1, 0
      %v722 = vsel %vm673, 1, 0
      %v723 = vsel %vm674, 1, 0
      %v724 = vsel %vm675, 1, 0
      %v725 = vsel %vm676, 1, 0
      %v726 = vsel %vm677, 1, 0
      %v727 = vsel %vm678, 1, 0
      %v728 = vsel %vm679, 1, 0
      %v729 = vsel %vm680, 1, 0
      %v730 = vsel %vm681, 1, 0
      %v731 = vsel %vm682, 1, 0
      %v732 = vsel %vm683, 1, 0
      %v733 = vsel %vm684, 1, 0
      %v734 = vsel %vm685, 1, 0
      %vm735 = vcmp.eq.s32.totalorder %v719, 1
      %vm736 = vcmp.eq.s32.totalorder %v720, 1
      %vm737 = vcmp.eq.s32.totalorder %v721, 1
      %vm738 = vcmp.eq.s32.totalorder %v722, 1
      %vm739 = vcmp.eq.s32.totalorder %v723, 1
      %vm740 = vcmp.eq.s32.totalorder %v724, 1
      %vm741 = vcmp.eq.s32.totalorder %v725, 1
      %vm742 = vcmp.eq.s32.totalorder %v726, 1
      %vm743 = vcmp.eq.s32.totalorder %v727, 1
      %vm744 = vcmp.eq.s32.totalorder %v728, 1
      %vm745 = vcmp.eq.s32.totalorder %v729, 1
      %vm746 = vcmp.eq.s32.totalorder %v730, 1
      %vm747 = vcmp.eq.s32.totalorder %v731, 1
      %vm748 = vcmp.eq.s32.totalorder %v732, 1
      %vm749 = vcmp.eq.s32.totalorder %v733, 1
      %vm750 = vcmp.eq.s32.totalorder %v734, 1
      %v751 = vsel %vm735, %v718, 0.0
      %v752 = vsel %vm736, %v717, 0.0
      %v753 = vsel %vm737, %v716, 0.0
      %v754 = vsel %vm738, %v715, 0.0
      %v755 = vsel %vm739, %v714, 0.0
      %v756 = vsel %vm740, %v713, 0.0
      %v757 = vsel %vm741, %v712, 0.0
      %v758 = vsel %vm742, %v711, 0.0
      %v759 = vsel %vm743, %v710, 0.0
      %v760 = vsel %vm744, %v709, 0.0
      %v761 = vsel %vm745, %v708, 0.0
      %v762 = vsel %vm746, %v707, 0.0
      %v763 = vsel %vm747, %v706, 0.0
      %v764 = vsel %vm748, %v705, 0.0
      %v765 = vsel %vm749, %v704, 0.0
      %v766 = vsel %vm750, %v703, 0.0
      %vm767 = vcmp.ne.s32.totalorder %v654, 15
      %vm768 = vcmp.ne.s32.totalorder %v655, 15
      %vm769 = vcmp.ne.s32.totalorder %v656, 15
      %vm770 = vcmp.ne.s32.totalorder %v657, 15
      %vm771 = vcmp.ne.s32.totalorder %v658, 15
      %vm772 = vcmp.ne.s32.totalorder %v659, 15
      %vm773 = vcmp.ne.s32.totalorder %v660, 15
      %vm774 = vcmp.ne.s32.totalorder %v661, 15
      %vm775 = vcmp.ne.s32.totalorder %v662, 15
      %vm776 = vcmp.ne.s32.totalorder %v663, 15
      %vm777 = vcmp.ne.s32.totalorder %v664, 15
      %vm778 = vcmp.ne.s32.totalorder %v665, 15
      %vm779 = vcmp.ne.s32.totalorder %v666, 15
      %vm780 = vcmp.ne.s32.totalorder %v667, 15
      %vm781 = vcmp.ne.s32.totalorder %v668, 15
      %vm782 = vcmp.ne.s32.totalorder %v669, 15
      %v783 = vrot.slane %v621, 1
      %v784 = vrot.slane %v622, 1
      %v785 = vrot.slane %v623, 1
      %v786 = vrot.slane %v624, 1
      %v787 = vrot.slane %v625, 1
      %v788 = vrot.slane %v626, 1
      %v789 = vrot.slane %v627, 1
      %v790 = vrot.slane %v628, 1
      %v791 = vrot.slane %v629, 1
      %v792 = vrot.slane %v630, 1
      %v793 = vrot.slane %v631, 1
      %v794 = vrot.slane %v632, 1
      %v795 = vrot.slane %v633, 1
      %v796 = vrot.slane %v634, 1
      %v797 = vrot.slane %v635, 1
      %v798 = vrot.slane %v636, 1
      %vm799 = vcmp.lt.s32.totalorder %v638, 7
      %v800 = vsel %vm799, %v797, %v798
      %v801 = vsel %vm799, %v796, %v797
      %v802 = vsel %vm799, %v795, %v796
      %v803 = vsel %vm799, %v794, %v795
      %v804 = vsel %vm799, %v793, %v794
      %v805 = vsel %vm799, %v792, %v793
      %v806 = vsel %vm799, %v791, %v792
      %v807 = vsel %vm799, %v790, %v791
      %v808 = vsel %vm799, %v789, %v790
      %v809 = vsel %vm799, %v788, %v789
      %v810 = vsel %vm799, %v787, %v788
      %v811 = vsel %vm799, %v786, %v787
      %v812 = vsel %vm799, %v785, %v786
      %v813 = vsel %vm799, %v784, %v785
      %v814 = vsel %vm799, %v783, %v784
      %v815 = vsel %vm799, %v798, %v783
      %v816 = vsel %vm767, 1, 0
      %v817 = vsel %vm768, 1, 0
      %v818 = vsel %vm769, 1, 0
      %v819 = vsel %vm770, 1, 0
      %v820 = vsel %vm771, 1, 0
      %v821 = vsel %vm772, 1, 0
      %v822 = vsel %vm773, 1, 0
      %v823 = vsel %vm774, 1, 0
      %v824 = vsel %vm775, 1, 0
      %v825 = vsel %vm776, 1, 0
      %v826 = vsel %vm777, 1, 0
      %v827 = vsel %vm778, 1, 0
      %v828 = vsel %vm779, 1, 0
      %v829 = vsel %vm780, 1, 0
      %v830 = vsel %vm781, 1, 0
      %v831 = vsel %vm782, 1, 0
      %vm832 = vcmp.eq.s32.totalorder %v816, 1
      %vm833 = vcmp.eq.s32.totalorder %v817, 1
      %vm834 = vcmp.eq.s32.totalorder %v818, 1
      %vm835 = vcmp.eq.s32.totalorder %v819, 1
      %vm836 = vcmp.eq.s32.totalorder %v820, 1
      %vm837 = vcmp.eq.s32.totalorder %v821, 1
      %vm838 = vcmp.eq.s32.totalorder %v822, 1
      %vm839 = vcmp.eq.s32.totalorder %v823, 1
      %vm840 = vcmp.eq.s32.totalorder %v824, 1
      %vm841 = vcmp.eq.s32.totalorder %v825, 1
      %vm842 = vcmp.eq.s32.totalorder %v826, 1
      %vm843 = vcmp.eq.s32.totalorder %v827, 1
      %vm844 = vcmp.eq.s32.totalorder %v828, 1
      %vm845 = vcmp.eq.s32.totalorder %v829, 1
      %vm846 = vcmp.eq.s32.totalorder %v830, 1
      %vm847 = vcmp.eq.s32.totalorder %v831, 1
      %v848 = vsel %vm832, %v814, 0.0
      %v849 = vsel %vm833, %v813, 0.0
      %v850 = vsel %vm834, %v812, 0.0
      %v851 = vsel %vm835, %v811, 0.0
      %v852 = vsel %vm836, %v810, 0.0
      %v853 = vsel %vm837, %v809, 0.0
      %v854 = vsel %vm838, %v808, 0.0
      %v855 = vsel %vm839, %v807, 0.0
      %v856 = vsel %vm840, %v806, 0.0
      %v857 = vsel %vm841, %v805, 0.0
      %v858 = vsel %vm842, %v804, 0.0
      %v859 = vsel %vm843, %v803, 0.0
      %v860 = vsel %vm844, %v802, 0.0
      %v861 = vsel %vm845, %v801, 0.0
      %v862 = vsel %vm846, %v800, 0.0
      %v863 = vsel %vm847, %v815, 0.0
      %880 = vrot.lane.b32.xlu0 %v621, 4
      %v881 = vpop.permute.xlu0 %880
      %882 = vrot.lane.b32.xlu0 %v622, 4
      %v883 = vpop.permute.xlu0 %882
      %884 = vrot.lane.b32.xlu0 %v623, 4
      %v885 = vpop.permute.xlu0 %884
      %886 = vrot.lane.b32.xlu0 %v624, 4
      %v887 = vpop.permute.xlu0 %886
      %888 = vrot.lane.b32.xlu0 %v625, 4
      %v889 = vpop.permute.xlu0 %888
      %890 = vrot.lane.b32.xlu0 %v626, 4
      %v891 = vpop.permute.xlu0 %890
      %892 = vrot.lane.b32.xlu0 %v627, 4
      %v893 = vpop.permute.xlu0 %892
      %894 = vrot.lane.b32.xlu0 %v628, 4
      %v895 = vpop.permute.xlu0 %894
      %896 = vrot.lane.b32.xlu0 %v629, 4
      %v897 = vpop.permute.xlu0 %896
      %898 = vrot.lane.b32.xlu0 %v630, 4
      %v899 = vpop.permute.xlu0 %898
      %900 = vrot.lane.b32.xlu0 %v631, 4
      %v901 = vpop.permute.xlu0 %900
      %902 = vrot.lane.b32.xlu0 %v632, 4
      %v903 = vpop.permute.xlu0 %902
      %904 = vrot.lane.b32.xlu0 %v633, 4
      %v905 = vpop.permute.xlu0 %904
      %906 = vrot.lane.b32.xlu0 %v634, 4
      %v907 = vpop.permute.xlu0 %906
      %908 = vrot.lane.b32.xlu0 %v635, 4
      %v909 = vpop.permute.xlu0 %908
      %910 = vrot.lane.b32.xlu0 %v636, 4
      %v911 = vpop.permute.xlu0 %910
      %944 = vrot.lane.b32.xlu0 %v848, 8
      %v945 = vpop.permute.xlu0 %944
      %946 = vrot.lane.b32.xlu0 %v849, 8
      %v947 = vpop.permute.xlu0 %946
      %948 = vrot.lane.b32.xlu0 %v850, 8
      %v949 = vpop.permute.xlu0 %948
      %950 = vrot.lane.b32.xlu0 %v851, 8
      %v951 = vpop.permute.xlu0 %950
      %952 = vrot.lane.b32.xlu0 %v852, 8
      %v953 = vpop.permute.xlu0 %952
      %954 = vrot.lane.b32.xlu0 %v853, 8
      %v955 = vpop.permute.xlu0 %954
      %956 = vrot.lane.b32.xlu0 %v854, 8
      %v957 = vpop.permute.xlu0 %956
      %958 = vrot.lane.b32.xlu0 %v855, 8
      %v959 = vpop.permute.xlu0 %958
      %960 = vrot.lane.b32.xlu0 %v856, 8
      %v961 = vpop.permute.xlu0 %960
      %962 = vrot.lane.b32.xlu0 %v857, 8
      %v963 = vpop.permute.xlu0 %962
      %964 = vrot.lane.b32.xlu0 %v858, 8
      %v965 = vpop.permute.xlu0 %964
      %966 = vrot.lane.b32.xlu0 %v859, 8
      %v967 = vpop.permute.xlu0 %966
      %968 = vrot.lane.b32.xlu0 %v860, 8
      %v969 = vpop.permute.xlu0 %968
      %970 = vrot.lane.b32.xlu0 %v861, 8
      %v971 = vpop.permute.xlu0 %970
      %972 = vrot.lane.b32.xlu0 %v862, 8
      %v973 = vpop.permute.xlu0 %972
      %974 = vrot.lane.b32.xlu0 %v863, 8
      %v975 = vpop.permute.xlu0 %974
      %vm992 = vcmask 31744
      %v993 = vsel %vm992, %v751, %v881
      %v994 = vsel %vm992, %v752, %v883
      %v995 = vsel %vm992, %v753, %v885
      %v996 = vsel %vm992, %v754, %v887
      %v997 = vsel %vm992, %v755, %v889
      %v998 = vsel %vm992, %v756, %v891
      %v999 = vsel %vm992, %v757, %v893
      %v1000 = vsel %vm992, %v758, %v895
      %v1001 = vsel %vm992, %v759, %v897
      %v1002 = vsel %vm992, %v760, %v899
      %v1003 = vsel %vm992, %v761, %v901
      %v1004 = vsel %vm992, %v762, %v903
      %v1005 = vsel %vm992, %v763, %v905
      %v1006 = vsel %vm992, %v764, %v907
      %v1007 = vsel %vm992, %v765, %v909
      %v1008 = vsel %vm992, %v766, %v911
      %vm1009 = vcmask 64512
      %v1010 = vsel %vm1009, %v993, %v945
      %v1011 = vsel %vm1009, %v994, %v947
      %v1012 = vsel %vm1009, %v995, %v949
      %v1013 = vsel %vm1009, %v996, %v951
      %v1014 = vsel %vm1009, %v997, %v953
      %v1015 = vsel %vm1009, %v998, %v955
      %v1016 = vsel %vm1009, %v999, %v957
      %v1017 = vsel %vm1009, %v1000, %v959
      %v1018 = vsel %vm1009, %v1001, %v961
      %v1019 = vsel %vm1009, %v1002, %v963
      %v1020 = vsel %vm1009, %v1003, %v965
      %v1021 = vsel %vm1009, %v1004, %v967
      %v1022 = vsel %vm1009, %v1005, %v969
      %v1023 = vsel %vm1009, %v1006, %v971
      %v1024 = vsel %vm1009, %v1007, %v973
      %v1025 = vsel %vm1009, %v1008, %v975
      %v1026 = vpack.c.bf16 %v1011, %v1010
      %v1027 = vpack.c.bf16 %v1013, %v1012
      %v1028 = vpack.c.bf16 %v1015, %v1014
      %v1029 = vpack.c.bf16 %v1017, %v1016
      %v1030 = vpack.c.bf16 %v1019, %v1018
      %v1031 = vpack.c.bf16 %v1021, %v1020
      %v1032 = vpack.c.bf16 %v1023, %v1022
      %v1033 = vpack.c.bf16 %v1025, %v1024
      %v1042 = vunpack.c.l.b16 %v1026
      %v1043 = vunpack.c.h.b16 %v1026
      %v1044 = vunpack.c.l.b16 %v1027
      %v1045 = vunpack.c.h.b16 %v1027
      %v1046 = vunpack.c.l.b16 %v1028
      %v1047 = vunpack.c.h.b16 %v1028
      %v1048 = vunpack.c.l.b16 %v1029
      %v1049 = vunpack.c.h.b16 %v1029
      %v1050 = vunpack.c.l.b16 %v1030
      %v1051 = vunpack.c.h.b16 %v1030
      %v1052 = vunpack.c.l.b16 %v1031
      %v1053 = vunpack.c.h.b16 %v1031
      %v1054 = vunpack.c.l.b16 %v1032
      %v1055 = vunpack.c.h.b16 %v1032
      %v1056 = vunpack.c.l.b16 %v1033
      %v1057 = vunpack.c.h.b16 %v1033
      %v1058 = vpack.c.b16 %v1042, %v1042
      %v1059 = vpack.c.b16 %v1043, %v1043
      %v1060 = vpack.c.b16 %v1044, %v1044
      %v1061 = vpack.c.b16 %v1045, %v1045
      %v1062 = vpack.c.b16 %v1046, %v1046
      %v1063 = vpack.c.b16 %v1047, %v1047
      %v1064 = vpack.c.b16 %v1048, %v1048
      %v1065 = vpack.c.b16 %v1049, %v1049
      %v1066 = vpack.c.b16 %v1050, %v1050
      %v1067 = vpack.c.b16 %v1051, %v1051
      %v1068 = vpack.c.b16 %v1052, %v1052
      %v1069 = vpack.c.b16 %v1053, %v1053
      %v1070 = vpack.c.b16 %v1054, %v1054
      %v1071 = vpack.c.b16 %v1055, %v1055
      %v1072 = vpack.c.b16 %v1056, %v1056
      %v1073 = vpack.c.b16 %v1057, %v1057
      %vm1090 = vcmask 93184
      %1091 = vst.msk [vmem:[#allocation2 + $0x8] sm:$0xf] %vm1090, %v1058
      %1092 = vst.msk [vmem:[#allocation2 + $0xc] sm:$0xf] %vm1090, %v1059
      %1093 = vst.msk [vmem:[#allocation2 + $0x10] sm:$0xf] %vm1090, %v1060
      %1094 = vst.msk [vmem:[#allocation2 + $0x14] sm:$0xf] %vm1090, %v1061
      %1095 = vst.msk [vmem:[#allocation2 + $0x18] sm:$0xf] %vm1090, %v1062
      %1096 = vst.msk [vmem:[#allocation2 + $0x1c] sm:$0xf] %vm1090, %v1063
      %1097 = vst.msk [vmem:[#allocation2 + $0x20] sm:$0xf] %vm1090, %v1064
      %1098 = vst.msk [vmem:[#allocation2 + $0x24] sm:$0xf] %vm1090, %v1065
      %1099 = vst.msk [vmem:[#allocation2 + $0x28] sm:$0xf] %vm1090, %v1066
      %1100 = vst.msk [vmem:[#allocation2 + $0x2c] sm:$0xf] %vm1090, %v1067
      %1101 = vst.msk [vmem:[#allocation2 + $0x30] sm:$0xf] %vm1090, %v1068
      %1102 = vst.msk [vmem:[#allocation2 + $0x34] sm:$0xf] %vm1090, %v1069
      %1103 = vst.msk [vmem:[#allocation2 + $0x38] sm:$0xf] %vm1090, %v1070
      %1104 = vst.msk [vmem:[#allocation2 + $0x3c] sm:$0xf] %vm1090, %v1071
      %1105 = vst.msk [vmem:[#allocation2 + $0x40] sm:$0xf] %vm1090, %v1072
      %1106 = vst.msk [vmem:[#allocation2 + $0x44] sm:$0xf] %vm1090, %v1073
      %s1107 = smul.u32 %s26, 8
      %s1108 = ssub.s32 %s1107, 1
      %p1109 = scmp.gt.s32.totalorder %s1108, 0
      %s1110 = scalar_select %p1109, %s1108, 0
      %s1111 = smul.u32 %s1110, 16
      %s1112 = sshra.s32 %s1111, 3
      %s1113 = sand.u32 %s1111, 7
      %s1114 = smul.addr %s1112, 4
      %s1115 = scalar_lea.vmem %s372, %s1114
      %v1116 = vld [vmem:[%s1115] sm:$0xf]
      %v1117 = vld [vmem:[%s1115 + $0x4] sm:$0xf]
      %v1118 = vld [vmem:[%s1] sm:$0xf]
      %v1119 = vld [vmem:[%s1 + $0x4] sm:$0xf]
      %v1122 = vunpack.c.l.b16 %v1116
      %v1123 = vunpack.c.l.b16 %v1117
      %v1124 = vpack.c.b16 %v1123, %v1122
      %v1127 = vunpack.c.l.b16 %v1118
      %v1128 = vunpack.c.l.b16 %v1119
      %v1129 = vpack.c.b16 %v1128, %v1127
      %v1132 = vsel %vm453, %v1124, 0
      %1134 = vmatprep.subr.bf16.mxu0 0
      %1135 = vmatpush1.bf16.msra.mxu0 0
      %1136 = vmatprep.subr.bf16.mxu0 0
      %1137 = vmatpush1.bf16.msra.mxu0 0
      %1138 = vmatprep.subr.bf16.mxu0 0
      %1139 = vmatpush1.bf16.msra.mxu0 0
      %1140 = vmatprep.subr.bf16.mxu0 0
      %1141 = vmatpush1.bf16.msra.mxu0 0
      %1142 = vmatprep.subr.bf16.mxu0 0
      %1143 = vmatpush1.bf16.msra.mxu0 0
      %1144 = vmatprep.subr.bf16.mxu0 0
      %1145 = vmatpush1.bf16.msra.mxu0 0
      %1146 = vmatprep.subr.bf16.mxu0 0
      %1147 = vmatpush1.bf16.msra.mxu0 0
      %1148 = vmatprep.subr.bf16.mxu0 0
      %1149 = vmatpush1.bf16.msra.mxu0 %v1129
      %1150 = vmatprep.subr.bf16.mxu0 0
      %1151 = vmatpush2.bf16.msra.mxu0 0
      %1152 = vmatprep.subr.bf16.mxu0 0
      %1153 = vmatpush2.bf16.msra.mxu0 0
      %1154 = vmatprep.subr.bf16.mxu0 0
      %1155 = vmatpush2.bf16.msra.mxu0 0
      %1156 = vmatprep.subr.bf16.mxu0 0
      %1157 = vmatpush2.bf16.msra.mxu0 0
      %1158 = vmatprep.subr.bf16.mxu0 0
      %1159 = vmatpush2.bf16.msra.mxu0 0
      %1160 = vmatprep.subr.bf16.mxu0 0
      %1161 = vmatpush2.bf16.msra.mxu0 0
      %1162 = vmatprep.subr.bf16.mxu0 0
      %1163 = vmatpush2.bf16.msra.mxu0 0
      %1164 = vmatprep.subr.bf16.mxu0 0
      %1165 = vmatpush2.bf16.msra.mxu0 0
      %1166 = vmatprep.mubr.bf16.mxu0 0
      %1167 = vmatmul.mubr.bf16.gmra.mxu0 %v1132
      %v1168 = vpop.f32.mrf.mxu0
      %v1169 = vadd.f32 0.0, %v1168
      %v1170 = vpop.f32.mrf.mxu0
      %v1171 = vpop.f32.mrf.mxu0
      %v1172 = vadd.f32 0.0, %v1171
      %v1173 = vpop.f32.mrf.mxu0
      %1174 = vdwg.mxu0
      %v1175 = vld [vmem:[%s2] sm:$0x1]
      %v1177 = vlaneseq
      %v1178 = vshrl.u32 %v1177, 7
      %v1179 = vsub.s32 0, %v1178
      %v1180 = vrot.slane %v1175, %v1179
      %v1182 = vmul.f32 %v1169, %v1180
      %v1183 = vmul.f32 %v1172, %v1180
      %v1184 = vld [vmem:[%s3] sm:$0x1]
      %v1186 = vlaneseq
      %v1187 = vshrl.u32 %v1186, 7
      %v1188 = vsub.s32 0, %v1187
      %v1189 = vrot.slane %v1184, %v1188
      %v1191 = vadd.f32 %v1182, %v1189
      %v1192 = vadd.f32 %v1183, %v1189
      %v1193 = vmax.f32 %v1191, 0.0
      %v1194 = vmax.f32 %v1192, 0.0
      %v1195 = vrot.slane %v1193, 7
      %v1196 = vrot.slane %v1194, 7
      %v1197 = vsel %vm702, %v1195, %v1196
      %v1198 = vsel %vm702, %v1196, %v1195
      %v1199 = vsel %vm735, %v1198, 0.0
      %v1200 = vsel %vm736, %v1197, 0.0
      %v1201 = vrot.slane %v1193, 1
      %v1202 = vrot.slane %v1194, 1
      %v1203 = vsel %vm799, %v1201, %v1202
      %v1204 = vsel %vm799, %v1202, %v1201
      %v1205 = vsel %vm832, %v1203, 0.0
      %v1206 = vsel %vm833, %v1204, 0.0
      %1209 = vrot.lane.b32.xlu0 %v1193, 4
      %v1210 = vpop.permute.xlu0 %1209
      %1211 = vrot.lane.b32.xlu0 %v1194, 4
      %v1212 = vpop.permute.xlu0 %1211
      %1217 = vrot.lane.b32.xlu0 %v1205, 8
      %v1218 = vpop.permute.xlu0 %1217
      %1219 = vrot.lane.b32.xlu0 %v1206, 8
      %v1220 = vpop.permute.xlu0 %1219
      %v1223 = vsel %vm992, %v1199, %v1210
      %v1224 = vsel %vm992, %v1200, %v1212
      %v1225 = vsel %vm1009, %v1223, %v1218
      %v1226 = vsel %vm1009, %v1224, %v1220
      %p1227 = scmp.gt.s32.totalorder %s26, 0
      %s1228 = scalar_select %p1227, 1, 0
      %s1229 = scvt.s32.f32 %s1228
      %v1230 = vstv %s1229
      %v1231 = vmul.f32 %v1225, %v1230
      %v1232 = vmul.f32 %v1226, %v1230
      %v1233 = vpack.c.bf16 %v1232, %v1231
      %v1235 = vunpack.c.l.b16 %v1233
      %v1236 = vunpack.c.h.b16 %v1233
      %v1237 = vpack.c.b16 %v1235, %v1235
      %v1238 = vpack.c.b16 %v1236, %v1236
      %1241 = vst.msk [vmem:[#allocation2] sm:$0xf] %vm1090, %v1237
      %1242 = vst.msk [vmem:[#allocation2 + $0x4] sm:$0xf] %vm1090, %v1238
      %s1243 = sadd.s32 %s1107, 8
      %p1244 = scmp.lt.s32.totalorder %s1243, 15
      %s1245 = scalar_select %p1244, %s1243, 15
      %s1246 = smul.u32 %s1245, 16
      %s1247 = sshra.s32 %s1246, 3
      %s1248 = sand.u32 %s1246, 7
      %s1249 = smul.addr %s1247, 4
      %s1250 = scalar_lea.vmem %s372, %s1249
      %v1251 = vld [vmem:[%s1250] sm:$0xf]
      %v1252 = vld [vmem:[%s1250 + $0x4] sm:$0xf]
      %v1253 = vld [vmem:[%s1] sm:$0xf]
      %v1254 = vld [vmem:[%s1 + $0x4] sm:$0xf]
      %v1257 = vunpack.c.l.b16 %v1251
      %v1258 = vunpack.c.l.b16 %v1252
      %v1259 = vpack.c.b16 %v1258, %v1257
      %v1262 = vunpack.c.l.b16 %v1253
      %v1263 = vunpack.c.l.b16 %v1254
      %v1264 = vpack.c.b16 %v1263, %v1262
      %v1267 = vsel %vm453, %v1259, 0
      %1269 = vmatprep.subr.bf16.mxu0 0
      %1270 = vmatpush1.bf16.msra.mxu0 0
      %1271 = vmatprep.subr.bf16.mxu0 0
      %1272 = vmatpush1.bf16.msra.mxu0 0
      %1273 = vmatprep.subr.bf16.mxu0 0
      %1274 = vmatpush1.bf16.msra.mxu0 0
      %1275 = vmatprep.subr.bf16.mxu0 0
      %1276 = vmatpush1.bf16.msra.mxu0 0
      %1277 = vmatprep.subr.bf16.mxu0 0
      %1278 = vmatpush1.bf16.msra.mxu0 0
      %1279 = vmatprep.subr.bf16.mxu0 0
      %1280 = vmatpush1.bf16.msra.mxu0 0
      %1281 = vmatprep.subr.bf16.mxu0 0
      %1282 = vmatpush1.bf16.msra.mxu0 0
      %1283 = vmatprep.subr.bf16.mxu0 0
      %1284 = vmatpush1.bf16.msra.mxu0 %v1264
      %1285 = vmatprep.subr.bf16.mxu0 0
      %1286 = vmatpush2.bf16.msra.mxu0 0
      %1287 = vmatprep.subr.bf16.mxu0 0
      %1288 = vmatpush2.bf16.msra.mxu0 0
      %1289 = vmatprep.subr.bf16.mxu0 0
      %1290 = vmatpush2.bf16.msra.mxu0 0
      %1291 = vmatprep.subr.bf16.mxu0 0
      %1292 = vmatpush2.bf16.msra.mxu0 0
      %1293 = vmatprep.subr.bf16.mxu0 0
      %1294 = vmatpush2.bf16.msra.mxu0 0
      %1295 = vmatprep.subr.bf16.mxu0 0
      %1296 = vmatpush2.bf16.msra.mxu0 0
      %1297 = vmatprep.subr.bf16.mxu0 0
      %1298 = vmatpush2.bf16.msra.mxu0 0
      %1299 = vmatprep.subr.bf16.mxu0 0
      %1300 = vmatpush2.bf16.msra.mxu0 0
      %1301 = vmatprep.mubr.bf16.mxu0 0
      %1302 = vmatmul.mubr.bf16.gmra.mxu0 %v1267
      %v1303 = vpop.f32.mrf.mxu0
      %v1304 = vadd.f32 0.0, %v1303
      %v1305 = vpop.f32.mrf.mxu0
      %v1306 = vpop.f32.mrf.mxu0
      %v1307 = vadd.f32 0.0, %v1306
      %v1308 = vpop.f32.mrf.mxu0
      %1309 = vdwg.mxu0
      %v1310 = vld [vmem:[%s2] sm:$0x1]
      %v1312 = vlaneseq
      %v1313 = vshrl.u32 %v1312, 7
      %v1314 = vsub.s32 0, %v1313
      %v1315 = vrot.slane %v1310, %v1314
      %v1317 = vmul.f32 %v1304, %v1315
      %v1318 = vmul.f32 %v1307, %v1315
      %v1319 = vld [vmem:[%s3] sm:$0x1]
      %v1321 = vlaneseq
      %v1322 = vshrl.u32 %v1321, 7
      %v1323 = vsub.s32 0, %v1322
      %v1324 = vrot.slane %v1319, %v1323
      %v1326 = vadd.f32 %v1317, %v1324
      %v1327 = vadd.f32 %v1318, %v1324
      %v1328 = vmax.f32 %v1326, 0.0
      %v1329 = vmax.f32 %v1327, 0.0
      %v1330 = vrot.slane %v1328, 7
      %v1331 = vrot.slane %v1329, 7
      %v1332 = vsel %vm702, %v1330, %v1331
      %v1333 = vsel %vm702, %v1331, %v1330
      %v1334 = vsel %vm735, %v1333, 0.0
      %v1335 = vsel %vm736, %v1332, 0.0
      %v1336 = vrot.slane %v1328, 1
      %v1337 = vrot.slane %v1329, 1
      %v1338 = vsel %vm799, %v1336, %v1337
      %v1339 = vsel %vm799, %v1337, %v1336
      %v1340 = vsel %vm832, %v1338, 0.0
      %v1341 = vsel %vm833, %v1339, 0.0
      %1344 = vrot.lane.b32.xlu0 %v1328, 4
      %v1345 = vpop.permute.xlu0 %1344
      %1346 = vrot.lane.b32.xlu0 %v1329, 4
      %v1347 = vpop.permute.xlu0 %1346
      %1352 = vrot.lane.b32.xlu0 %v1340, 8
      %v1353 = vpop.permute.xlu0 %1352
      %1354 = vrot.lane.b32.xlu0 %v1341, 8
      %v1355 = vpop.permute.xlu0 %1354
      %v1358 = vsel %vm992, %v1334, %v1345
      %v1359 = vsel %vm992, %v1335, %v1347
      %v1360 = vsel %vm1009, %v1358, %v1353
      %v1361 = vsel %vm1009, %v1359, %v1355
      %p1362 = scmp.lt.s32.totalorder %s26, 1
      %s1363 = scalar_select %p1362, 1, 0
      %s1364 = scvt.s32.f32 %s1363
      %v1365 = vstv %s1364
      %v1366 = vmul.f32 %v1360, %v1365
      %v1367 = vmul.f32 %v1361, %v1365
      %v1368 = vpack.c.bf16 %v1367, %v1366
      %v1370 = vunpack.c.l.b16 %v1368
      %v1371 = vunpack.c.h.b16 %v1368
      %v1372 = vpack.c.b16 %v1370, %v1370
      %v1373 = vpack.c.b16 %v1371, %v1371
      %1376 = vst.msk [vmem:[#allocation2 + $0x48] sm:$0xf] %vm1090, %v1372
      %1377 = vst.msk [vmem:[#allocation2 + $0x4c] sm:$0xf] %vm1090, %v1373
      %v1378 = vld [vmem:[#allocation2] sm:$0xf]
      %v1379 = vld [vmem:[#allocation2 + $0x4] sm:$0xf]
      %v1380 = vld [vmem:[#allocation2 + $0x8] sm:$0xf]
      %v1381 = vld [vmem:[#allocation2 + $0xc] sm:$0xf]
      %v1382 = vld [vmem:[#allocation2 + $0x10] sm:$0xf]
      %v1383 = vld [vmem:[#allocation2 + $0x14] sm:$0xf]
      %v1384 = vld [vmem:[#allocation2 + $0x18] sm:$0xf]
      %v1385 = vld [vmem:[#allocation2 + $0x1c] sm:$0xf]
      %v1386 = vld [vmem:[#allocation2 + $0x20] sm:$0xf]
      %v1387 = vld [vmem:[#allocation2 + $0x24] sm:$0xf]
      %v1388 = vld [vmem:[#allocation2 + $0x28] sm:$0xf]
      %v1389 = vld [vmem:[#allocation2 + $0x2c] sm:$0xf]
      %v1390 = vld [vmem:[#allocation2 + $0x30] sm:$0xf]
      %v1391 = vld [vmem:[#allocation2 + $0x34] sm:$0xf]
      %v1392 = vld [vmem:[#allocation2 + $0x38] sm:$0xf]
      %v1393 = vld [vmem:[#allocation2 + $0x3c] sm:$0xf]
      %v1394 = vld [vmem:[%s4] sm:$0xf]
      %v1395 = vld [vmem:[%s4 + $0x4] sm:$0x3]
      %v1396 = vld [vmem:[#allocation2 + $0x40] sm:$0xf]
      %v1397 = vld [vmem:[#allocation2 + $0x44] sm:$0xf]
      %s1398 = scalar_lea.vmem %s4, 8
      %v1399 = vld [vmem:[%s1398] sm:$0xf]
      %v1400 = vld [vmem:[%s1398 + $0x4] sm:$0x3]
      %v1417 = vunpack.c.l.b16 %v1380
      %v1418 = vunpack.c.l.b16 %v1381
      %v1419 = vunpack.c.l.b16 %v1382
      %v1420 = vunpack.c.l.b16 %v1383
      %v1421 = vunpack.c.l.b16 %v1384
      %v1422 = vunpack.c.l.b16 %v1385
      %v1423 = vunpack.c.l.b16 %v1386
      %v1424 = vunpack.c.l.b16 %v1387
      %v1425 = vunpack.c.l.b16 %v1388
      %v1426 = vunpack.c.l.b16 %v1389
      %v1427 = vunpack.c.l.b16 %v1390
      %v1428 = vunpack.c.l.b16 %v1391
      %v1429 = vunpack.c.l.b16 %v1392
      %v1430 = vunpack.c.l.b16 %v1393
      %v1431 = vunpack.c.l.b16 %v1396
      %v1432 = vunpack.c.l.b16 %v1397
      %v1433 = vpack.c.b16 %v1418, %v1417
      %v1434 = vpack.c.b16 %v1420, %v1419
      %v1435 = vpack.c.b16 %v1422, %v1421
      %v1436 = vpack.c.b16 %v1424, %v1423
      %v1437 = vpack.c.b16 %v1426, %v1425
      %v1438 = vpack.c.b16 %v1428, %v1427
      %v1439 = vpack.c.b16 %v1430, %v1429
      %v1440 = vpack.c.b16 %v1432, %v1431
      %v1443 = vunpack.c.l.b16 %v1399
      %v1444 = vunpack.c.l.b16 %v1400
      %v1445 = vpack.c.b16 %v1444, %v1443
      %vm1446 = vcmask 97280
      %v1448 = vsel %vm1446, %v1433, 0
      %v1451 = vsel %vm1446, %v1434, 0
      %v1454 = vsel %vm1446, %v1435, 0
      %v1457 = vsel %vm1446, %v1436, 0
      %v1460 = vsel %vm1446, %v1437, 0
      %v1463 = vsel %vm1446, %v1438, 0
      %v1466 = vsel %vm1446, %v1439, 0
      %v1469 = vsel %vm1446, %v1440, 0
      %vm1471 = vcmask 1045504
      %v1473 = vsel %vm1471, %v1445, 0
      %1475 = vmatprep.subr.bf16.mxu0 0
      %1476 = vmatpush1.bf16.msra.mxu0 0
      %1477 = vmatprep.subr.bf16.mxu0 0
      %1478 = vmatpush1.bf16.msra.mxu0 0
      %1479 = vmatprep.subr.bf16.mxu0 0
      %1480 = vmatpush1.bf16.msra.mxu0 0
      %1481 = vmatprep.subr.bf16.mxu0 0
      %1482 = vmatpush1.bf16.msra.mxu0 0
      %1483 = vmatprep.subr.bf16.mxu0 0
      %1484 = vmatpush1.bf16.msra.mxu0 0
      %1485 = vmatprep.subr.bf16.mxu0 0
      %1486 = vmatpush1.bf16.msra.mxu0 0
      %1487 = vmatprep.subr.bf16.mxu0 0
      %1488 = vmatpush1.bf16.msra.mxu0 0
      %1489 = vmatprep.subr.bf16.mxu0 0
      %1490 = vmatpush1.bf16.msra.mxu0 %v1473
      %1491 = vmatprep.subr.bf16.mxu0 0
      %1492 = vmatpush2.bf16.msra.mxu0 0
      %1493 = vmatprep.subr.bf16.mxu0 0
      %1494 = vmatpush2.bf16.msra.mxu0 0
      %1495 = vmatprep.subr.bf16.mxu0 0
      %1496 = vmatpush2.bf16.msra.mxu0 0
      %1497 = vmatprep.subr.bf16.mxu0 0
      %1498 = vmatpush2.bf16.msra.mxu0 0
      %1499 = vmatprep.subr.bf16.mxu0 0
      %1500 = vmatpush2.bf16.msra.mxu0 0
      %1501 = vmatprep.subr.bf16.mxu0 0
      %1502 = vmatpush2.bf16.msra.mxu0 0
      %1503 = vmatprep.subr.bf16.mxu0 0
      %1504 = vmatpush2.bf16.msra.mxu0 0
      %1505 = vmatprep.subr.bf16.mxu0 0
      %1506 = vmatpush2.bf16.msra.mxu0 0
      %1507 = vmatprep.mubr.bf16.mxu0 0
      %1508 = vmatmul.mubr.bf16.gmra.mxu0 %v1448
      %v1509 = vpop.f32.mrf.mxu0
      %v1510 = vadd.f32 0.0, %v1509
      %v1511 = vpop.f32.mrf.mxu0
      %v1512 = vpop.f32.mrf.mxu0
      %v1513 = vadd.f32 0.0, %v1512
      %v1514 = vpop.f32.mrf.mxu0
      %1515 = vmatprep.mubr.bf16.mxu0 0
      %1516 = vmatmul.mubr.bf16.gmra.mxu0 %v1451
      %v1517 = vpop.f32.mrf.mxu0
      %v1518 = vadd.f32 0.0, %v1517
      %v1519 = vpop.f32.mrf.mxu0
      %v1520 = vpop.f32.mrf.mxu0
      %v1521 = vadd.f32 0.0, %v1520
      %v1522 = vpop.f32.mrf.mxu0
      %1523 = vmatprep.mubr.bf16.mxu0 0
      %1524 = vmatmul.mubr.bf16.gmra.mxu0 %v1454
      %v1525 = vpop.f32.mrf.mxu0
      %v1526 = vadd.f32 0.0, %v1525
      %v1527 = vpop.f32.mrf.mxu0
      %v1528 = vpop.f32.mrf.mxu0
      %v1529 = vadd.f32 0.0, %v1528
      %v1530 = vpop.f32.mrf.mxu0
      %1531 = vmatprep.mubr.bf16.mxu0 0
      %1532 = vmatmul.mubr.bf16.gmra.mxu0 %v1457
      %v1533 = vpop.f32.mrf.mxu0
      %v1534 = vadd.f32 0.0, %v1533
      %v1535 = vpop.f32.mrf.mxu0
      %v1536 = vpop.f32.mrf.mxu0
      %v1537 = vadd.f32 0.0, %v1536
      %v1538 = vpop.f32.mrf.mxu0
      %1539 = vmatprep.mubr.bf16.mxu0 0
      %1540 = vmatmul.mubr.bf16.gmra.mxu0 %v1460
      %v1541 = vpop.f32.mrf.mxu0
      %v1542 = vadd.f32 0.0, %v1541
      %v1543 = vpop.f32.mrf.mxu0
      %v1544 = vpop.f32.mrf.mxu0
      %v1545 = vadd.f32 0.0, %v1544
      %v1546 = vpop.f32.mrf.mxu0
      %1547 = vmatprep.mubr.bf16.mxu0 0
      %1548 = vmatmul.mubr.bf16.gmra.mxu0 %v1463
      %v1549 = vpop.f32.mrf.mxu0
      %v1550 = vadd.f32 0.0, %v1549
      %v1551 = vpop.f32.mrf.mxu0
      %v1552 = vpop.f32.mrf.mxu0
      %v1553 = vadd.f32 0.0, %v1552
      %v1554 = vpop.f32.mrf.mxu0
      %1555 = vmatprep.mubr.bf16.mxu0 0
      %1556 = vmatmul.mubr.bf16.gmra.mxu0 %v1466
      %v1557 = vpop.f32.mrf.mxu0
      %v1558 = vadd.f32 0.0, %v1557
      %v1559 = vpop.f32.mrf.mxu0
      %v1560 = vpop.f32.mrf.mxu0
      %v1561 = vadd.f32 0.0, %v1560
      %v1562 = vpop.f32.mrf.mxu0
      %1563 = vmatprep.mubr.bf16.mxu0 0
      %1564 = vmatmul.mubr.bf16.gmra.mxu0 %v1469
      %v1565 = vpop.f32.mrf.mxu0
      %v1566 = vadd.f32 0.0, %v1565
      %v1567 = vpop.f32.mrf.mxu0
      %v1568 = vpop.f32.mrf.mxu0
      %v1569 = vadd.f32 0.0, %v1568
      %v1570 = vpop.f32.mrf.mxu0
      %1571 = vdwg.mxu0
      %v1574 = vunpack.c.l.b16 %v1378
      %v1575 = vunpack.c.l.b16 %v1379
      %v1576 = vpack.c.b16 %v1575, %v1574
      %v1579 = vunpack.c.l.b16 %v1394
      %v1580 = vunpack.c.l.b16 %v1395
      %v1581 = vpack.c.b16 %v1580, %v1579
      %v1583 = vsel %vm1446, %v1576, 0
      %v1586 = vsel %vm1471, %v1581, 0
      %1588 = vmatprep.subr.bf16.mxu0 0
      %1589 = vmatpush1.bf16.msra.mxu0 0
      %1590 = vmatprep.subr.bf16.mxu0 0
      %1591 = vmatpush1.bf16.msra.mxu0 0
      %1592 = vmatprep.subr.bf16.mxu0 0
      %1593 = vmatpush1.bf16.msra.mxu0 0
      %1594 = vmatprep.subr.bf16.mxu0 0
      %1595 = vmatpush1.bf16.msra.mxu0 0
      %1596 = vmatprep.subr.bf16.mxu0 0
      %1597 = vmatpush1.bf16.msra.mxu0 0
      %1598 = vmatprep.subr.bf16.mxu0 0
      %1599 = vmatpush1.bf16.msra.mxu0 0
      %1600 = vmatprep.subr.bf16.mxu0 0
      %1601 = vmatpush1.bf16.msra.mxu0 0
      %1602 = vmatprep.subr.bf16.mxu0 0
      %1603 = vmatpush1.bf16.msra.mxu0 %v1586
      %1604 = vmatprep.subr.bf16.mxu0 0
      %1605 = vmatpush2.bf16.msra.mxu0 0
      %1606 = vmatprep.subr.bf16.mxu0 0
      %1607 = vmatpush2.bf16.msra.mxu0 0
      %1608 = vmatprep.subr.bf16.mxu0 0
      %1609 = vmatpush2.bf16.msra.mxu0 0
      %1610 = vmatprep.subr.bf16.mxu0 0
      %1611 = vmatpush2.bf16.msra.mxu0 0
      %1612 = vmatprep.subr.bf16.mxu0 0
      %1613 = vmatpush2.bf16.msra.mxu0 0
      %1614 = vmatprep.subr.bf16.mxu0 0
      %1615 = vmatpush2.bf16.msra.mxu0 0
      %1616 = vmatprep.subr.bf16.mxu0 0
      %1617 = vmatpush2.bf16.msra.mxu0 0
      %1618 = vmatprep.subr.bf16.mxu0 0
      %1619 = vmatpush2.bf16.msra.mxu0 0
      %1620 = vmatprep.mubr.bf16.mxu0 0
      %1621 = vmatmul.mubr.bf16.gmra.mxu0 %v1583
      %v1622 = vpop.f32.mrf.mxu0
      %v1623 = vadd.f32 %v1510, %v1622
      %v1624 = vpop.f32.mrf.mxu0
      %v1625 = vpop.f32.mrf.mxu0
      %v1626 = vadd.f32 %v1513, %v1625
      %v1627 = vpop.f32.mrf.mxu0
      %1628 = vmatprep.mubr.bf16.mxu0 0
      %1629 = vmatmul.mubr.bf16.gmra.mxu0 %v1448
      %v1630 = vpop.f32.mrf.mxu0
      %v1631 = vadd.f32 %v1518, %v1630
      %v1632 = vpop.f32.mrf.mxu0
      %v1633 = vpop.f32.mrf.mxu0
      %v1634 = vadd.f32 %v1521, %v1633
      %v1635 = vpop.f32.mrf.mxu0
      %1636 = vmatprep.mubr.bf16.mxu0 0
      %1637 = vmatmul.mubr.bf16.gmra.mxu0 %v1451
      %v1638 = vpop.f32.mrf.mxu0
      %v1639 = vadd.f32 %v1526, %v1638
      %v1640 = vpop.f32.mrf.mxu0
      %v1641 = vpop.f32.mrf.mxu0
      %v1642 = vadd.f32 %v1529, %v1641
      %v1643 = vpop.f32.mrf.mxu0
      %1644 = vmatprep.mubr.bf16.mxu0 0
      %1645 = vmatmul.mubr.bf16.gmra.mxu0 %v1454
      %v1646 = vpop.f32.mrf.mxu0
      %v1647 = vadd.f32 %v1534, %v1646
      %v1648 = vpop.f32.mrf.mxu0
      %v1649 = vpop.f32.mrf.mxu0
      %v1650 = vadd.f32 %v1537, %v1649
      %v1651 = vpop.f32.mrf.mxu0
      %1652 = vmatprep.mubr.bf16.mxu0 0
      %1653 = vmatmul.mubr.bf16.gmra.mxu0 %v1457
      %v1654 = vpop.f32.mrf.mxu0
      %v1655 = vadd.f32 %v1542, %v1654
      %v1656 = vpop.f32.mrf.mxu0
      %v1657 = vpop.f32.mrf.mxu0
      %v1658 = vadd.f32 %v1545, %v1657
      %v1659 = vpop.f32.mrf.mxu0
      %1660 = vmatprep.mubr.bf16.mxu0 0
      %1661 = vmatmul.mubr.bf16.gmra.mxu0 %v1460
      %v1662 = vpop.f32.mrf.mxu0
      %v1663 = vadd.f32 %v1550, %v1662
      %v1664 = vpop.f32.mrf.mxu0
      %v1665 = vpop.f32.mrf.mxu0
      %v1666 = vadd.f32 %v1553, %v1665
      %v1667 = vpop.f32.mrf.mxu0
      %1668 = vmatprep.mubr.bf16.mxu0 0
      %1669 = vmatmul.mubr.bf16.gmra.mxu0 %v1463
      %v1670 = vpop.f32.mrf.mxu0
      %v1671 = vadd.f32 %v1558, %v1670
      %v1672 = vpop.f32.mrf.mxu0
      %v1673 = vpop.f32.mrf.mxu0
      %v1674 = vadd.f32 %v1561, %v1673
      %v1675 = vpop.f32.mrf.mxu0
      %1676 = vmatprep.mubr.bf16.mxu0 0
      %1677 = vmatmul.mubr.bf16.gmra.mxu0 %v1466
      %v1678 = vpop.f32.mrf.mxu0
      %v1679 = vadd.f32 %v1566, %v1678
      %v1680 = vpop.f32.mrf.mxu0
      %v1681 = vpop.f32.mrf.mxu0
      %v1682 = vadd.f32 %v1569, %v1681
      %v1683 = vpop.f32.mrf.mxu0
      %1684 = vdwg.mxu0
      %v1685 = vld [vmem:[#allocation2 + $0x10] sm:$0xf]
      %v1686 = vld [vmem:[#allocation2 + $0x14] sm:$0xf]
      %v1687 = vld [vmem:[#allocation2 + $0x18] sm:$0xf]
      %v1688 = vld [vmem:[#allocation2 + $0x1c] sm:$0xf]
      %v1689 = vld [vmem:[#allocation2 + $0x20] sm:$0xf]
      %v1690 = vld [vmem:[#allocation2 + $0x24] sm:$0xf]
      %v1691 = vld [vmem:[#allocation2 + $0x28] sm:$0xf]
      %v1692 = vld [vmem:[#allocation2 + $0x2c] sm:$0xf]
      %v1693 = vld [vmem:[#allocation2 + $0x30] sm:$0xf]
      %v1694 = vld [vmem:[#allocation2 + $0x34] sm:$0xf]
      %v1695 = vld [vmem:[#allocation2 + $0x38] sm:$0xf]
      %v1696 = vld [vmem:[#allocation2 + $0x3c] sm:$0xf]
      %v1697 = vld [vmem:[#allocation2 + $0x40] sm:$0xf]
      %v1698 = vld [vmem:[#allocation2 + $0x44] sm:$0xf]
      %v1699 = vld [vmem:[#allocation2 + $0x48] sm:$0xf]
      %v1700 = vld [vmem:[#allocation2 + $0x4c] sm:$0xf]
      %s1701 = scalar_lea.vmem %s4, 16
      %v1702 = vld [vmem:[%s1701] sm:$0xf]
      %v1703 = vld [vmem:[%s1701 + $0x4] sm:$0x3]
      %v1720 = vunpack.c.l.b16 %v1685
      %v1721 = vunpack.c.l.b16 %v1686
      %v1722 = vunpack.c.l.b16 %v1687
      %v1723 = vunpack.c.l.b16 %v1688
      %v1724 = vunpack.c.l.b16 %v1689
      %v1725 = vunpack.c.l.b16 %v1690
      %v1726 = vunpack.c.l.b16 %v1691
      %v1727 = vunpack.c.l.b16 %v1692
      %v1728 = vunpack.c.l.b16 %v1693
      %v1729 = vunpack.c.l.b16 %v1694
      %v1730 = vunpack.c.l.b16 %v1695
      %v1731 = vunpack.c.l.b16 %v1696
      %v1732 = vunpack.c.l.b16 %v1697
      %v1733 = vunpack.c.l.b16 %v1698
      %v1734 = vunpack.c.l.b16 %v1699
      %v1735 = vunpack.c.l.b16 %v1700
      %v1736 = vpack.c.b16 %v1721, %v1720
      %v1737 = vpack.c.b16 %v1723, %v1722
      %v1738 = vpack.c.b16 %v1725, %v1724
      %v1739 = vpack.c.b16 %v1727, %v1726
      %v1740 = vpack.c.b16 %v1729, %v1728
      %v1741 = vpack.c.b16 %v1731, %v1730
      %v1742 = vpack.c.b16 %v1733, %v1732
      %v1743 = vpack.c.b16 %v1735, %v1734
      %v1746 = vunpack.c.l.b16 %v1702
      %v1747 = vunpack.c.l.b16 %v1703
      %v1748 = vpack.c.b16 %v1747, %v1746
      %v1750 = vsel %vm1446, %v1736, 0
      %v1753 = vsel %vm1446, %v1737, 0
      %v1756 = vsel %vm1446, %v1738, 0
      %v1759 = vsel %vm1446, %v1739, 0
      %v1762 = vsel %vm1446, %v1740, 0
      %v1765 = vsel %vm1446, %v1741, 0
      %v1768 = vsel %vm1446, %v1742, 0
      %v1771 = vsel %vm1446, %v1743, 0
      %v1774 = vsel %vm1471, %v1748, 0
      %1776 = vmatprep.subr.bf16.mxu0 0
      %1777 = vmatpush1.bf16.msra.mxu0 0
      %1778 = vmatprep.subr.bf16.mxu0 0
      %1779 = vmatpush1.bf16.msra.mxu0 0
      %1780 = vmatprep.subr.bf16.mxu0 0
      %1781 = vmatpush1.bf16.msra.mxu0 0
      %1782 = vmatprep.subr.bf16.mxu0 0
      %1783 = vmatpush1.bf16.msra.mxu0 0
      %1784 = vmatprep.subr.bf16.mxu0 0
      %1785 = vmatpush1.bf16.msra.mxu0 0
      %1786 = vmatprep.subr.bf16.mxu0 0
      %1787 = vmatpush1.bf16.msra.mxu0 0
      %1788 = vmatprep.subr.bf16.mxu0 0
      %1789 = vmatpush1.bf16.msra.mxu0 0
      %1790 = vmatprep.subr.bf16.mxu0 0
      %1791 = vmatpush1.bf16.msra.mxu0 %v1774
      %1792 = vmatprep.subr.bf16.mxu0 0
      %1793 = vmatpush2.bf16.msra.mxu0 0
      %1794 = vmatprep.subr.bf16.mxu0 0
      %1795 = vmatpush2.bf16.msra.mxu0 0
      %1796 = vmatprep.subr.bf16.mxu0 0
      %1797 = vmatpush2.bf16.msra.mxu0 0
      %1798 = vmatprep.subr.bf16.mxu0 0
      %1799 = vmatpush2.bf16.msra.mxu0 0
      %1800 = vmatprep.subr.bf16.mxu0 0
      %1801 = vmatpush2.bf16.msra.mxu0 0
      %1802 = vmatprep.subr.bf16.mxu0 0
      %1803 = vmatpush2.bf16.msra.mxu0 0
      %1804 = vmatprep.subr.bf16.mxu0 0
      %1805 = vmatpush2.bf16.msra.mxu0 0
      %1806 = vmatprep.subr.bf16.mxu0 0
      %1807 = vmatpush2.bf16.msra.mxu0 0
      %1808 = vmatprep.mubr.bf16.mxu0 0
      %1809 = vmatmul.mubr.bf16.gmra.mxu0 %v1750
      %v1810 = vpop.f32.mrf.mxu0
      %v1811 = vadd.f32 0.0, %v1810
      %v1812 = vpop.f32.mrf.mxu0
      %v1813 = vpop.f32.mrf.mxu0
      %v1814 = vadd.f32 0.0, %v1813
      %v1815 = vpop.f32.mrf.mxu0
      %1816 = vmatprep.mubr.bf16.mxu0 0
      %1817 = vmatmul.mubr.bf16.gmra.mxu0 %v1753
      %v1818 = vpop.f32.mrf.mxu0
      %v1819 = vadd.f32 0.0, %v1818
      %v1820 = vpop.f32.mrf.mxu0
      %v1821 = vpop.f32.mrf.mxu0
      %v1822 = vadd.f32 0.0, %v1821
      %v1823 = vpop.f32.mrf.mxu0
      %1824 = vmatprep.mubr.bf16.mxu0 0
      %1825 = vmatmul.mubr.bf16.gmra.mxu0 %v1756
      %v1826 = vpop.f32.mrf.mxu0
      %v1827 = vadd.f32 0.0, %v1826
      %v1828 = vpop.f32.mrf.mxu0
      %v1829 = vpop.f32.mrf.mxu0
      %v1830 = vadd.f32 0.0, %v1829
      %v1831 = vpop.f32.mrf.mxu0
      %1832 = vmatprep.mubr.bf16.mxu0 0
      %1833 = vmatmul.mubr.bf16.gmra.mxu0 %v1759
      %v1834 = vpop.f32.mrf.mxu0
      %v1835 = vadd.f32 0.0, %v1834
      %v1836 = vpop.f32.mrf.mxu0
      %v1837 = vpop.f32.mrf.mxu0
      %v1838 = vadd.f32 0.0, %v1837
      %v1839 = vpop.f32.mrf.mxu0
      %1840 = vmatprep.mubr.bf16.mxu0 0
      %1841 = vmatmul.mubr.bf16.gmra.mxu0 %v1762
      %v1842 = vpop.f32.mrf.mxu0
      %v1843 = vadd.f32 0.0, %v1842
      %v1844 = vpop.f32.mrf.mxu0
      %v1845 = vpop.f32.mrf.mxu0
      %v1846 = vadd.f32 0.0, %v1845
      %v1847 = vpop.f32.mrf.mxu0
      %1848 = vmatprep.mubr.bf16.mxu0 0
      %1849 = vmatmul.mubr.bf16.gmra.mxu0 %v1765
      %v1850 = vpop.f32.mrf.mxu0
      %v1851 = vadd.f32 0.0, %v1850
      %v1852 = vpop.f32.mrf.mxu0
      %v1853 = vpop.f32.mrf.mxu0
      %v1854 = vadd.f32 0.0, %v1853
      %v1855 = vpop.f32.mrf.mxu0
      %1856 = vmatprep.mubr.bf16.mxu0 0
      %1857 = vmatmul.mubr.bf16.gmra.mxu0 %v1768
      %v1858 = vpop.f32.mrf.mxu0
      %v1859 = vadd.f32 0.0, %v1858
      %v1860 = vpop.f32.mrf.mxu0
      %v1861 = vpop.f32.mrf.mxu0
      %v1862 = vadd.f32 0.0, %v1861
      %v1863 = vpop.f32.mrf.mxu0
      %1864 = vmatprep.mubr.bf16.mxu0 0
      %1865 = vmatmul.mubr.bf16.gmra.mxu0 %v1771
      %v1866 = vpop.f32.mrf.mxu0
      %v1867 = vadd.f32 0.0, %v1866
      %v1868 = vpop.f32.mrf.mxu0
      %v1869 = vpop.f32.mrf.mxu0
      %v1870 = vadd.f32 0.0, %v1869
      %v1871 = vpop.f32.mrf.mxu0
      %1872 = vdwg.mxu0
      %v1873 = vadd.f32 %v1623, %v1811
      %v1874 = vadd.f32 %v1626, %v1814
      %v1875 = vadd.f32 %v1631, %v1819
      %v1876 = vadd.f32 %v1634, %v1822
      %v1877 = vadd.f32 %v1639, %v1827
      %v1878 = vadd.f32 %v1642, %v1830
      %v1879 = vadd.f32 %v1647, %v1835
      %v1880 = vadd.f32 %v1650, %v1838
      %v1881 = vadd.f32 %v1655, %v1843
      %v1882 = vadd.f32 %v1658, %v1846
      %v1883 = vadd.f32 %v1663, %v1851
      %v1884 = vadd.f32 %v1666, %v1854
      %v1885 = vadd.f32 %v1671, %v1859
      %v1886 = vadd.f32 %v1674, %v1862
      %v1887 = vadd.f32 %v1679, %v1867
      %v1888 = vadd.f32 %v1682, %v1870
      %v1889 = vld [vmem:[%s5] sm:$0x1]
      %v1891 = vlaneseq
      %v1892 = vshrl.u32 %v1891, 7
      %v1893 = vsub.s32 0, %v1892
      %v1894 = vrot.slane %v1889, %v1893
      %v1896 = vmul.f32 %v1873, %v1894
      %v1897 = vmul.f32 %v1874, %v1894
      %v1898 = vmul.f32 %v1875, %v1894
      %v1899 = vmul.f32 %v1876, %v1894
      %v1900 = vmul.f32 %v1877, %v1894
      %v1901 = vmul.f32 %v1878, %v1894
      %v1902 = vmul.f32 %v1879, %v1894
      %v1903 = vmul.f32 %v1880, %v1894
      %v1904 = vmul.f32 %v1881, %v1894
      %v1905 = vmul.f32 %v1882, %v1894
      %v1906 = vmul.f32 %v1883, %v1894
      %v1907 = vmul.f32 %v1884, %v1894
      %v1908 = vmul.f32 %v1885, %v1894
      %v1909 = vmul.f32 %v1886, %v1894
      %v1910 = vmul.f32 %v1887, %v1894
      %v1911 = vmul.f32 %v1888, %v1894
      %v1912 = vld [vmem:[%s6] sm:$0x1]
      %v1914 = vlaneseq
      %v1915 = vshrl.u32 %v1914, 7
      %v1916 = vsub.s32 0, %v1915
      %v1917 = vrot.slane %v1912, %v1916
      %v1919 = vadd.f32 %v1896, %v1917
      %v1920 = vadd.f32 %v1897, %v1917
      %v1921 = vadd.f32 %v1898, %v1917
      %v1922 = vadd.f32 %v1899, %v1917
      %v1923 = vadd.f32 %v1900, %v1917
      %v1924 = vadd.f32 %v1901, %v1917
      %v1925 = vadd.f32 %v1902, %v1917
      %v1926 = vadd.f32 %v1903, %v1917
      %v1927 = vadd.f32 %v1904, %v1917
      %v1928 = vadd.f32 %v1905, %v1917
      %v1929 = vadd.f32 %v1906, %v1917
      %v1930 = vadd.f32 %v1907, %v1917
      %v1931 = vadd.f32 %v1908, %v1917
      %v1932 = vadd.f32 %v1909, %v1917
      %v1933 = vadd.f32 %v1910, %v1917
      %v1934 = vadd.f32 %v1911, %v1917
      %v1935 = vmax.f32 %v1919, 0.0
      %v1936 = vmax.f32 %v1920, 0.0
      %v1937 = vmax.f32 %v1921, 0.0
      %v1938 = vmax.f32 %v1922, 0.0
      %v1939 = vmax.f32 %v1923, 0.0
      %v1940 = vmax.f32 %v1924, 0.0
      %v1941 = vmax.f32 %v1925, 0.0
      %v1942 = vmax.f32 %v1926, 0.0
      %v1943 = vmax.f32 %v1927, 0.0
      %v1944 = vmax.f32 %v1928, 0.0
      %v1945 = vmax.f32 %v1929, 0.0
      %v1946 = vmax.f32 %v1930, 0.0
      %v1947 = vmax.f32 %v1931, 0.0
      %v1948 = vmax.f32 %v1932, 0.0
      %v1949 = vmax.f32 %v1933, 0.0
      %v1950 = vmax.f32 %v1934, 0.0
      %v1951 = vpack.c.bf16 %v1936, %v1935
      %v1952 = vpack.c.bf16 %v1938, %v1937
      %v1953 = vpack.c.bf16 %v1940, %v1939
      %v1954 = vpack.c.bf16 %v1942, %v1941
      %v1955 = vpack.c.bf16 %v1944, %v1943
      %v1956 = vpack.c.bf16 %v1946, %v1945
      %v1957 = vpack.c.bf16 %v1948, %v1947
      %v1958 = vpack.c.bf16 %v1950, %v1949
      %v1959 = vld [vmem:[%s7] sm:$0x3]
      %v1961 = vsel %vm992, %v1951, 0
      %v1964 = vsel %vm992, %v1952, 0
      %v1967 = vsel %vm992, %v1953, 0
      %v1970 = vsel %vm992, %v1954, 0
      %v1973 = vsel %vm992, %v1955, 0
      %v1976 = vsel %vm992, %v1956, 0
      %v1979 = vsel %vm992, %v1957, 0
      %v1982 = vsel %vm992, %v1958, 0
      %vm1984 = vcmask 1041408
      %v1986 = vsel %vm1984, %v1959, 0
      %1988 = vmatprep.subr.bf16.mxu0 0
      %1989 = vmatpush1.bf16.msra.mxu0 0
      %1990 = vmatprep.subr.bf16.mxu0 0
      %1991 = vmatpush1.bf16.msra.mxu0 0
      %1992 = vmatprep.subr.bf16.mxu0 0
      %1993 = vmatpush1.bf16.msra.mxu0 0
      %1994 = vmatprep.subr.bf16.mxu0 0
      %1995 = vmatpush1.bf16.msra.mxu0 0
      %1996 = vmatprep.subr.bf16.mxu0 0
      %1997 = vmatpush1.bf16.msra.mxu0 0
      %1998 = vmatprep.subr.bf16.mxu0 0
      %1999 = vmatpush1.bf16.msra.mxu0 0
      %2000 = vmatprep.subr.bf16.mxu0 0
      %2001 = vmatpush1.bf16.msra.mxu0 0
      %2002 = vmatprep.subr.bf16.mxu0 0
      %2003 = vmatpush1.bf16.msra.mxu0 %v1986
      %2004 = vmatprep.subr.bf16.mxu0 0
      %2005 = vmatpush2.bf16.msra.mxu0 0
      %2006 = vmatprep.subr.bf16.mxu0 0
      %2007 = vmatpush2.bf16.msra.mxu0 0
      %2008 = vmatprep.subr.bf16.mxu0 0
      %2009 = vmatpush2.bf16.msra.mxu0 0
      %2010 = vmatprep.subr.bf16.mxu0 0
      %2011 = vmatpush2.bf16.msra.mxu0 0
      %2012 = vmatprep.subr.bf16.mxu0 0
      %2013 = vmatpush2.bf16.msra.mxu0 0
      %2014 = vmatprep.subr.bf16.mxu0 0
      %2015 = vmatpush2.bf16.msra.mxu0 0
      %2016 = vmatprep.subr.bf16.mxu0 0
      %2017 = vmatpush2.bf16.msra.mxu0 0
      %2018 = vmatprep.subr.bf16.mxu0 0
      %2019 = vmatpush2.bf16.msra.mxu0 0
      %2020 = vmatprep.mubr.bf16.mxu0 0
      %2021 = vmatmul.mubr.bf16.gmra.mxu0 %v1961
      %v2022 = vpop.f32.mrf.mxu0
      %v2023 = vadd.f32 0.0, %v2022
      %v2024 = vpop.f32.mrf.mxu0
      %v2025 = vpop.f32.mrf.mxu0
      %v2026 = vadd.f32 0.0, %v2025
      %v2027 = vpop.f32.mrf.mxu0
      %2028 = vmatprep.mubr.bf16.mxu0 0
      %2029 = vmatmul.mubr.bf16.gmra.mxu0 %v1964
      %v2030 = vpop.f32.mrf.mxu0
      %v2031 = vadd.f32 0.0, %v2030
      %v2032 = vpop.f32.mrf.mxu0
      %v2033 = vpop.f32.mrf.mxu0
      %v2034 = vadd.f32 0.0, %v2033
      %v2035 = vpop.f32.mrf.mxu0
      %2036 = vmatprep.mubr.bf16.mxu0 0
      %2037 = vmatmul.mubr.bf16.gmra.mxu0 %v1967
      %v2038 = vpop.f32.mrf.mxu0
      %v2039 = vadd.f32 0.0, %v2038
      %v2040 = vpop.f32.mrf.mxu0
      %v2041 = vpop.f32.mrf.mxu0
      %v2042 = vadd.f32 0.0, %v2041
      %v2043 = vpop.f32.mrf.mxu0
      %2044 = vmatprep.mubr.bf16.mxu0 0
      %2045 = vmatmul.mubr.bf16.gmra.mxu0 %v1970
      %v2046 = vpop.f32.mrf.mxu0
      %v2047 = vadd.f32 0.0, %v2046
      %v2048 = vpop.f32.mrf.mxu0
      %v2049 = vpop.f32.mrf.mxu0
      %v2050 = vadd.f32 0.0, %v2049
      %v2051 = vpop.f32.mrf.mxu0
      %2052 = vmatprep.mubr.bf16.mxu0 0
      %2053 = vmatmul.mubr.bf16.gmra.mxu0 %v1973
      %v2054 = vpop.f32.mrf.mxu0
      %v2055 = vadd.f32 0.0, %v2054
      %v2056 = vpop.f32.mrf.mxu0
      %v2057 = vpop.f32.mrf.mxu0
      %v2058 = vadd.f32 0.0, %v2057
      %v2059 = vpop.f32.mrf.mxu0
      %2060 = vmatprep.mubr.bf16.mxu0 0
      %2061 = vmatmul.mubr.bf16.gmra.mxu0 %v1976
      %v2062 = vpop.f32.mrf.mxu0
      %v2063 = vadd.f32 0.0, %v2062
      %v2064 = vpop.f32.mrf.mxu0
      %v2065 = vpop.f32.mrf.mxu0
      %v2066 = vadd.f32 0.0, %v2065
      %v2067 = vpop.f32.mrf.mxu0
      %2068 = vmatprep.mubr.bf16.mxu0 0
      %2069 = vmatmul.mubr.bf16.gmra.mxu0 %v1979
      %v2070 = vpop.f32.mrf.mxu0
      %v2071 = vadd.f32 0.0, %v2070
      %v2072 = vpop.f32.mrf.mxu0
      %v2073 = vpop.f32.mrf.mxu0
      %v2074 = vadd.f32 0.0, %v2073
      %v2075 = vpop.f32.mrf.mxu0
      %2076 = vmatprep.mubr.bf16.mxu0 0
      %2077 = vmatmul.mubr.bf16.gmra.mxu0 %v1982
      %v2078 = vpop.f32.mrf.mxu0
      %v2079 = vadd.f32 0.0, %v2078
      %v2080 = vpop.f32.mrf.mxu0
      %v2081 = vpop.f32.mrf.mxu0
      %v2082 = vadd.f32 0.0, %v2081
      %v2083 = vpop.f32.mrf.mxu0
      %2084 = vdwg.mxu0
      %v2085 = vld [vmem:[%s8] sm:$0x1]
      %v2087 = vlaneseq
      %v2088 = vshrl.u32 %v2087, 7
      %v2089 = vsub.s32 0, %v2088
      %v2090 = vrot.slane %v2085, %v2089
      %v2092 = vmul.f32 %v2023, %v2090
      %v2093 = vmul.f32 %v2026, %v2090
      %v2094 = vmul.f32 %v2031, %v2090
      %v2095 = vmul.f32 %v2034, %v2090
      %v2096 = vmul.f32 %v2039, %v2090
      %v2097 = vmul.f32 %v2042, %v2090
      %v2098 = vmul.f32 %v2047, %v2090
      %v2099 = vmul.f32 %v2050, %v2090
      %v2100 = vmul.f32 %v2055, %v2090
      %v2101 = vmul.f32 %v2058, %v2090
      %v2102 = vmul.f32 %v2063, %v2090
      %v2103 = vmul.f32 %v2066, %v2090
      %v2104 = vmul.f32 %v2071, %v2090
      %v2105 = vmul.f32 %v2074, %v2090
      %v2106 = vmul.f32 %v2079, %v2090
      %v2107 = vmul.f32 %v2082, %v2090
      %v2108 = vld [vmem:[%s9] sm:$0x1]
      %v2110 = vlaneseq
      %v2111 = vshrl.u32 %v2110, 7
      %v2112 = vsub.s32 0, %v2111
      %v2113 = vrot.slane %v2108, %v2112
      %v2115 = vadd.f32 %v2092, %v2113
      %v2116 = vadd.f32 %v2093, %v2113
      %v2117 = vadd.f32 %v2094, %v2113
      %v2118 = vadd.f32 %v2095, %v2113
      %v2119 = vadd.f32 %v2096, %v2113
      %v2120 = vadd.f32 %v2097, %v2113
      %v2121 = vadd.f32 %v2098, %v2113
      %v2122 = vadd.f32 %v2099, %v2113
      %v2123 = vadd.f32 %v2100, %v2113
      %v2124 = vadd.f32 %v2101, %v2113
      %v2125 = vadd.f32 %v2102, %v2113
      %v2126 = vadd.f32 %v2103, %v2113
      %v2127 = vadd.f32 %v2104, %v2113
      %v2128 = vadd.f32 %v2105, %v2113
      %v2129 = vadd.f32 %v2106, %v2113
      %v2130 = vadd.f32 %v2107, %v2113
      %v2131 = vld [vmem:[%s388] sm:$0xf]
      %v2132 = vld [vmem:[%s388 + $0x4] sm:$0xf]
      %v2133 = vld [vmem:[%s388 + $0x8] sm:$0xf]
      %v2134 = vld [vmem:[%s388 + $0xc] sm:$0xf]
      %v2135 = vld [vmem:[%s388 + $0x10] sm:$0xf]
      %v2136 = vld [vmem:[%s388 + $0x14] sm:$0xf]
      %v2137 = vld [vmem:[%s388 + $0x18] sm:$0xf]
      %v2138 = vld [vmem:[%s388 + $0x1c] sm:$0xf]
      %v2139 = vld [vmem:[%s388 + $0x20] sm:$0xf]
      %v2140 = vld [vmem:[%s388 + $0x24] sm:$0xf]
      %v2141 = vld [vmem:[%s388 + $0x28] sm:$0xf]
      %v2142 = vld [vmem:[%s388 + $0x2c] sm:$0xf]
      %v2143 = vld [vmem:[%s388 + $0x30] sm:$0xf]
      %v2144 = vld [vmem:[%s388 + $0x34] sm:$0xf]
      %v2145 = vld [vmem:[%s388 + $0x38] sm:$0xf]
      %v2146 = vld [vmem:[%s388 + $0x3c] sm:$0xf]
      %v2147 = vunpack.c.l.bf16 %v2131
      %v2148 = vunpack.c.l.bf16 %v2132
      %v2149 = vunpack.c.l.bf16 %v2133
      %v2150 = vunpack.c.l.bf16 %v2134
      %v2151 = vunpack.c.l.bf16 %v2135
      %v2152 = vunpack.c.l.bf16 %v2136
      %v2153 = vunpack.c.l.bf16 %v2137
      %v2154 = vunpack.c.l.bf16 %v2138
      %v2155 = vunpack.c.l.bf16 %v2139
      %v2156 = vunpack.c.l.bf16 %v2140
      %v2157 = vunpack.c.l.bf16 %v2141
      %v2158 = vunpack.c.l.bf16 %v2142
      %v2159 = vunpack.c.l.bf16 %v2143
      %v2160 = vunpack.c.l.bf16 %v2144
      %v2161 = vunpack.c.l.bf16 %v2145
      %v2162 = vunpack.c.l.bf16 %v2146
      %v2163 = vadd.f32 %v2115, %v2147
      %v2164 = vadd.f32 %v2116, %v2148
      %v2165 = vadd.f32 %v2117, %v2149
      %v2166 = vadd.f32 %v2118, %v2150
      %v2167 = vadd.f32 %v2119, %v2151
      %v2168 = vadd.f32 %v2120, %v2152
      %v2169 = vadd.f32 %v2121, %v2153
      %v2170 = vadd.f32 %v2122, %v2154
      %v2171 = vadd.f32 %v2123, %v2155
      %v2172 = vadd.f32 %v2124, %v2156
      %v2173 = vadd.f32 %v2125, %v2157
      %v2174 = vadd.f32 %v2126, %v2158
      %v2175 = vadd.f32 %v2127, %v2159
      %v2176 = vadd.f32 %v2128, %v2160
      %v2177 = vadd.f32 %v2129, %v2161
      %v2178 = vadd.f32 %v2130, %v2162
      %v2179 = vmax.f32 %v2163, 0.0
      %v2180 = vmax.f32 %v2164, 0.0
      %v2181 = vmax.f32 %v2165, 0.0
      %v2182 = vmax.f32 %v2166, 0.0
      %v2183 = vmax.f32 %v2167, 0.0
      %v2184 = vmax.f32 %v2168, 0.0
      %v2185 = vmax.f32 %v2169, 0.0
      %v2186 = vmax.f32 %v2170, 0.0
      %v2187 = vmax.f32 %v2171, 0.0
      %v2188 = vmax.f32 %v2172, 0.0
      %v2189 = vmax.f32 %v2173, 0.0
      %v2190 = vmax.f32 %v2174, 0.0
      %v2191 = vmax.f32 %v2175, 0.0
      %v2192 = vmax.f32 %v2176, 0.0
      %v2193 = vmax.f32 %v2177, 0.0
      %v2194 = vmax.f32 %v2178, 0.0
      %v2195 = vpack.c.bf16 %v2180, %v2179
      %v2196 = vpack.c.bf16 %v2182, %v2181
      %v2197 = vpack.c.bf16 %v2184, %v2183
      %v2198 = vpack.c.bf16 %v2186, %v2185
      %v2199 = vpack.c.bf16 %v2188, %v2187
      %v2200 = vpack.c.bf16 %v2190, %v2189
      %v2201 = vpack.c.bf16 %v2192, %v2191
      %v2202 = vpack.c.bf16 %v2194, %v2193
      %v2211 = vunpack.c.l.b16 %v2195
      %v2212 = vunpack.c.h.b16 %v2195
      %v2213 = vunpack.c.l.b16 %v2196
      %v2214 = vunpack.c.h.b16 %v2196
      %v2215 = vunpack.c.l.b16 %v2197
      %v2216 = vunpack.c.h.b16 %v2197
      %v2217 = vunpack.c.l.b16 %v2198
      %v2218 = vunpack.c.h.b16 %v2198
      %v2219 = vunpack.c.l.b16 %v2199
      %v2220 = vunpack.c.h.b16 %v2199
      %v2221 = vunpack.c.l.b16 %v2200
      %v2222 = vunpack.c.h.b16 %v2200
      %v2223 = vunpack.c.l.b16 %v2201
      %v2224 = vunpack.c.h.b16 %v2201
      %v2225 = vunpack.c.l.b16 %v2202
      %v2226 = vunpack.c.h.b16 %v2202
      %v2227 = vpack.c.b16 %v2211, %v2211
      %v2228 = vpack.c.b16 %v2212, %v2212
      %v2229 = vpack.c.b16 %v2213, %v2213
      %v2230 = vpack.c.b16 %v2214, %v2214
      %v2231 = vpack.c.b16 %v2215, %v2215
      %v2232 = vpack.c.b16 %v2216, %v2216
      %v2233 = vpack.c.b16 %v2217, %v2217
      %v2234 = vpack.c.b16 %v2218, %v2218
      %v2235 = vpack.c.b16 %v2219, %v2219
      %v2236 = vpack.c.b16 %v2220, %v2220
      %v2237 = vpack.c.b16 %v2221, %v2221
      %v2238 = vpack.c.b16 %v2222, %v2222
      %v2239 = vpack.c.b16 %v2223, %v2223
      %v2240 = vpack.c.b16 %v2224, %v2224
      %v2241 = vpack.c.b16 %v2225, %v2225
      %v2242 = vpack.c.b16 %v2226, %v2226
      %vm2259 = vcmask 125952
      %2260 = vst.msk [vmem:[%s381] sm:$0xf] %vm2259, %v2227
      %2261 = vst.msk [vmem:[%s381 + $0x4] sm:$0xf] %vm2259, %v2228
      %2262 = vst.msk [vmem:[%s381 + $0x8] sm:$0xf] %vm2259, %v2229
      %2263 = vst.msk [vmem:[%s381 + $0xc] sm:$0xf] %vm2259, %v2230
      %2264 = vst.msk [vmem:[%s381 + $0x10] sm:$0xf] %vm2259, %v2231
      %2265 = vst.msk [vmem:[%s381 + $0x14] sm:$0xf] %vm2259, %v2232
      %2266 = vst.msk [vmem:[%s381 + $0x18] sm:$0xf] %vm2259, %v2233
      %2267 = vst.msk [vmem:[%s381 + $0x1c] sm:$0xf] %vm2259, %v2234
      %2268 = vst.msk [vmem:[%s381 + $0x20] sm:$0xf] %vm2259, %v2235
      %2269 = vst.msk [vmem:[%s381 + $0x24] sm:$0xf] %vm2259, %v2236
      %2270 = vst.msk [vmem:[%s381 + $0x28] sm:$0xf] %vm2259, %v2237
      %2271 = vst.msk [vmem:[%s381 + $0x2c] sm:$0xf] %vm2259, %v2238
      %2272 = vst.msk [vmem:[%s381 + $0x30] sm:$0xf] %vm2259, %v2239
      %2273 = vst.msk [vmem:[%s381 + $0x34] sm:$0xf] %vm2259, %v2240
      %2274 = vst.msk [vmem:[%s381 + $0x38] sm:$0xf] %vm2259, %v2241
      %2275 = vst.msk [vmem:[%s381 + $0x3c] sm:$0xf] %vm2259, %v2242
      %s2276 = smul.u32 16, %s26
      %p2277 = scmp.lt.s32.totalorder %s25, 1
      %s2278 = scalar_select %p2277, %s25, 1
      %p2279 = scmp.lt.s32.totalorder %s2276, 31
      %s2280 = scalar_select %p2279, %s2276, 31
      %s2281 = smul.addr %s2278, 32
      %s2282 = sadd.s32 %s2280, %s2281
      %s2283 = smul.addr %s2282, 4
      %s2284 = scalar_lea.vmem %s10, %s2283
      // Predicated region
      $region61: #{tpu_custom_call.1} parent=59 // pred_check
        %p2285 = pneg %p268
      $region62: #{tpu_custom_call.1} parent=59 // pred_check_branch
        %2287 = sbr.rel (%p2285) target = $region64
      $region63: #{tpu_custom_call.1} parent=59 // pred_region
        %s2288 = smul.u32 16, %s26
      $region64: #{tpu_custom_call.1} parent=59 // pred_fallthru
        _
    $region60: #{tpu_custom_call.1} parent=5 // pred_fallthru
      _
    %p2289 = scmp.le.s32.totalorder 2, %s16
    // Predicated region
    $region65: #{tpu_custom_call.1} parent=5 // pred_check
      %p2290 = pneg %p2289
    $region66: #{tpu_custom_call.1} parent=5 // pred_check_branch
      %2292 = sbr.rel (%p2290) target = $region68
    $region67: #{tpu_custom_call.1} parent=5 // pred_region
      %s2293 = ssub.s32 %s16, 2
      // Predicated region
      $region69: #{tpu_custom_call.1} parent=67 // pred_check
        %p2294 = pneg %p274
      $region70: #{tpu_custom_call.1} parent=67 // pred_check_branch
        %2296 = sbr.rel (%p2294) target = $region72
      $region71: #{tpu_custom_call.1} parent=67 // pred_region
        %s2297 = smul.u32 16, %s28
        %p2298 = scmp.lt.s32.totalorder %s27, 1
        %s2299 = scalar_select %p2298, %s27, 1
        %p2300 = scmp.lt.s32.totalorder %s2297, 31
        %s2301 = scalar_select %p2300, %s2297, 31
        %s2302 = smul.addr %s2299, 32
        %s2303 = sadd.s32 %s2301, %s2302
        %s2304 = smul.addr %s2303, 4
        %s2305 = scalar_lea.vmem %s10, %s2304
      $region72: #{tpu_custom_call.1} parent=67 // pred_fallthru
        _
    $region68: #{tpu_custom_call.1} parent=5 // pred_fallthru
      _
  $region6: #{tpu_custom_call.1} parent=0 // loop_footer
    %s20 = sadd.s32 1, %s16
  $region7: #{tpu_custom_call.1} parent=0 // loop_footer_branch
    %15 = sbr.rel target = $region3
  $region8: #{tpu_custom_call.1} parent=0 // loop_exit
    _

</llo_original>
